<compile_context>
chip_gen: v7x
topology: tpu7x:2x2x1
jax: 0.10.0
libtpu: 0.0.40
codegen_flags: <defaults>
</compile_context>

<pallas_src>
import jax
import jax.numpy as jnp
from jax import lax
from jax.experimental import pallas as pl
from jax.experimental.pallas import tpu as pltpu


# ----------------------------------------------------------------------------
# Packed-parameter slab layout (row offsets; all 8-sublane aligned for the
# matmul weights, so no static slice crosses an (8,128) tile boundary).
#   mlp1 = Lin(4,16)+ReLU, Lin(16,32)+ReLU
#   mlp2 = Lin(35,16)+ReLU, Lin(16,1)+Sigmoid
# ----------------------------------------------------------------------------
_W1A_X = 0    # (3, 16)  w1a rows for x_j features
_W1A_E = 3    # (1, 16)  w1a row  for edge_attr feature
_B1A = 4      # (1, 16)
_W1B = 8      # (16, 32)
_B1B = 24     # (1, 32)
_W2A_X = 32   # (3, 16)  w2a rows for x features
_W2A_A = 40   # (32, 16) w2a rows for aggregated features
_B2A = 72     # (1, 16)
_W2B = 80     # (16, 1)
_B2B = 96     # (1, 1)
_SLAB_ROWS = 104
_SLAB_COLS = 32


def pack_params(p):
    slab = jnp.zeros((_SLAB_ROWS, _SLAB_COLS), jnp.float32)
    slab = slab.at[_W1A_X:_W1A_X + 3, 0:16].set(p["w1a"][:3])
    slab = slab.at[_W1A_E:_W1A_E + 1, 0:16].set(p["w1a"][3:4])
    slab = slab.at[_B1A:_B1A + 1, 0:16].set(p["b1a"])
    slab = slab.at[_W1B:_W1B + 16, 0:32].set(p["w1b"])
    slab = slab.at[_B1B:_B1B + 1, 0:32].set(p["b1b"])
    slab = slab.at[_W2A_X:_W2A_X + 3, 0:16].set(p["w2a"][:3])
    slab = slab.at[_W2A_A:_W2A_A + 32, 0:16].set(p["w2a"][3:])
    slab = slab.at[_B2A:_B2A + 1, 0:16].set(p["b2a"])
    slab = slab.at[_W2B:_W2B + 16, 0:1].set(p["w2b"])
    slab = slab.at[_B2B:_B2B + 1, 0:1].set(p["b2b"])
    return slab


# ----------------------------------------------------------------------------
# Fused kernel: 3 shared-weight GConvLayer passes, everything resident in VMEM.
# ----------------------------------------------------------------------------
def gcnet_kernel(x_ref, ea_ref, src_ref, dst_ref, p_ref, out_ref):
    x0 = x_ref[...]                      # (N, 3) f32
    ea = ea_ref[...]                     # (E, 1) f32
    src = src_ref[...]                   # (E, 1) i32
    dst = dst_ref[...]                   # (1, E) i32
    N = x0.shape[0]
    E = ea.shape[0]

    # ---- unpack weights from the slab (static slices, loaded once) ----
    w1a_x = p_ref[_W1A_X:_W1A_X + 3, 0:16]    # (3, 16)
    w1a_e = p_ref[_W1A_E:_W1A_E + 1, 0:16]    # (1, 16)
    b1a = p_ref[_B1A:_B1A + 1, 0:16]          # (1, 16)
    w1b = p_ref[_W1B:_W1B + 16, 0:32]         # (16, 32)
    b1b = p_ref[_B1B:_B1B + 1, 0:32]          # (1, 32)
    w2a_x = p_ref[_W2A_X:_W2A_X + 3, 0:16]    # (3, 16)
    w2a_a = p_ref[_W2A_A:_W2A_A + 32, 0:16]   # (32, 16)
    b2a = p_ref[_B2A:_B2A + 1, 0:16]          # (1, 16)
    w2b = p_ref[_W2B:_W2B + 16, 0:1]          # (16, 1)
    b2b = p_ref[_B2B:_B2B + 1, 0:1]           # (1, 1)

    # ---- loop-invariant terms, hoisted out of the 3-layer loop ----
    # One-hot gather matrix for x_j = x[edge_index[0]]  (kept as an MXU matmul:
    # fine at toy sizes; an SMEM-indexed gather is only worthwhile at large N).
    onehot_en = (src == lax.broadcasted_iota(jnp.int32, (E, N), 1)
                 ).astype(jnp.float32)                                   # (E, N)
    # Target mask for the scatter-max.
    dst_mask = (lax.broadcasted_iota(jnp.int32, (N, E), 0) == dst)       # (N, E) bool
    # edge_attr contribution to mlp1's first layer + bias (constant across layers).
    edge_term = ea * w1a_e + b1a                                         # (E, 16)
    # Bias broadcasts materialized once (JAX does not CSE broadcast_in_dim).
    b1b_e = jnp.broadcast_to(b1b, (E, 32))
    b2a_n = jnp.broadcast_to(b2a, (N, 16))
    b2b_n = jnp.broadcast_to(b2b, (N, 1))
    # Lane selector for splicing comb into feature column 2.
    col2 = lax.broadcasted_iota(jnp.int32, (N, 3), 1) == 2               # (N, 3) bool

    x_cur = x0                                                           # (N, 3)
    for _ in range(3):   # 3 shared-weight layer applications, weights stay resident
        # message: mlp1(cat([x_j, edge_attr]))  (concat split across the matmul)
        x_j = jnp.dot(onehot_en, x_cur, preferred_element_type=jnp.float32)   # (E, 3)
        h1 = jnp.maximum(
            jnp.dot(x_j, w1a_x, preferred_element_type=jnp.float32) + edge_term, 0.0)
        msg = jnp.maximum(
            jnp.dot(h1, w1b, preferred_element_type=jnp.float32) + b1b_e, 0.0)  # (E, 32)

        # aggregate: scatter-max of messages into target nodes.
        # 2D running max over edges (no (N,E,32) rank-3 intermediate).
        # PyG 'max' aggregation fills nodes with no incoming edge with 0; msg is
        # post-ReLU (>= 0), so the 0-initialized masked max matches PyG exactly.
        aggr = jnp.zeros((N, 32), jnp.float32)
        for e in range(E):   # static unroll: E is a compile-time constant
            aggr = jnp.maximum(
                aggr, jnp.where(dst_mask[:, e:e + 1], msg[e:e + 1, :], 0.0))

        # update: comb = mlp2(cat([x, aggr])); x <- cat([x[:, :2], comb])
        h2 = jnp.dot(x_cur, w2a_x, preferred_element_type=jnp.float32)
        h2 = h2 + jnp.dot(aggr, w2a_a, preferred_element_type=jnp.float32)
        h2 = jnp.maximum(h2 + b2a_n, 0.0)                                     # (N, 16)
        comb = jax.nn.sigmoid(
            jnp.dot(h2, w2b, preferred_element_type=jnp.float32) + b2b_n)     # (N, 1)
        x_cur = jnp.where(col2, comb, x_cur)   # replace only feature column 2

    # Single full store (one masked vst instead of two partial stores + copy).
    out_ref[...] = x_cur


def gcnet_forward(x, edge_attr, edge_index, params):
    """GCNet.forward: three applications of the shared-weight GConvLayer,
    fused into a single gridless pallas_call (whole graph fits in VMEM).
    For batched / large graphs, add a grid axis with
    dimension_semantics=("parallel",) to use both v7x TensorCores."""
    N = x.shape[0]
    E = edge_index.shape[1]
    src_col = edge_index[0].reshape(E, 1).astype(jnp.int32)
    dst_row = edge_index[1].reshape(1, E).astype(jnp.int32)
    pslab = pack_params(params)
    vmem = pl.BlockSpec(memory_space=pltpu.MemorySpace.VMEM)
    return pl.pallas_call(
        gcnet_kernel,
        out_shape=jax.ShapeDtypeStruct((N, 3), jnp.float32),
        in_specs=[vmem] * 5,
        out_specs=vmem,
    )(x, edge_attr, src_col, dst_row, pslab)


# ----------------------------------------------------------------------------
# Deterministic parameter init (PyTorch Linear-style uniform fan-in bounds).
# mlp1 = [4 -> 16 -> 32] (ReLU after each), mlp2 = [35 -> 16 (ReLU) -> 1 (Sigmoid)]
# ----------------------------------------------------------------------------
def init_params(key):
    def lin(k, fan_in, fan_out):
        kw, kb = jax.random.split(k)
        bound = 1.0 / (fan_in ** 0.5)
        w = jax.random.uniform(kw, (fan_in, fan_out), jnp.float32, -bound, bound)
        b = jax.random.uniform(kb, (1, fan_out), jnp.float32, -bound, bound)
        return w, b

    k = jax.random.split(key, 4)
    w1a, b1a = lin(k[0], 4, 16)
    w1b, b1b = lin(k[1], 16, 32)
    w2a, b2a = lin(k[2], 35, 16)
    w2b, b2b = lin(k[3], 16, 1)
    return dict(w1a=w1a, b1a=b1a, w1b=w1b, b1b=b1b,
                w2a=w2a, b2a=b2a, w2b=w2b, b2b=b2b)


# Pure-JAX reference of one GConvLayer (correctness check only).
def gconv_ref(x, edge_attr, src, dst, p):
    hp = lax.Precision.HIGHEST
    x_j = x[src]                                                  # (E, 3)
    m_in = jnp.concatenate([x_j, edge_attr], axis=1)              # (E, 4)
    h1 = jax.nn.relu(jnp.dot(m_in, p["w1a"], precision=hp) + p["b1a"])
    msg = jax.nn.relu(jnp.dot(h1, p["w1b"], precision=hp) + p["b1b"])
    aggr = jnp.zeros((x.shape[0], msg.shape[1]), msg.dtype).at[dst].max(msg)
    u = jnp.concatenate([x, aggr], axis=1)                        # (N, 35)
    h2 = jax.nn.relu(jnp.dot(u, p["w2a"], precision=hp) + p["b2a"])
    comb = jax.nn.sigmoid(jnp.dot(h2, p["w2b"], precision=hp) + p["b2b"])
    return jnp.concatenate([x[:, :2], comb], axis=1)


if __name__ == "__main__":
    key = jax.random.PRNGKey(0)
    kx, ke, ks, kd, kp = jax.random.split(key, 5)

    N, E = 8, 16                                  # nodes, edges
    x = jax.random.normal(kx, (N, 3), jnp.float32)            # data.x
    edge_attr = jax.random.normal(ke, (E, 1), jnp.float32)    # data.edge_attr
    src = jax.random.randint(ks, (E,), 0, N, jnp.int32)
    dst = jax.random.randint(kd, (E,), 0, N, jnp.int32)
    edge_index = jnp.stack([src, dst], axis=0)                 # data.edge_index (2, E)

    params = init_params(kp)

    fwd = jax.jit(gcnet_forward)
    out = fwd(x, edge_attr, edge_index, params)
    out = jax.block_until_ready(out)

    # Verify against the pure-JAX reference of the PyTorch semantics.
    ref = x
    for _ in range(3):
        ref = gconv_ref(ref, edge_attr, src, dst, params)
    assert out.shape == (N, 3)
    assert jnp.allclose(out, ref, rtol=1e-4, atol=1e-4), (out, ref)

    print("KERNEL_OK")
</pallas_src>

<mosaic_0001>
module attributes {stable_mosaic.version = 11 : i64} {
  func.func @gcnet_kernel(%arg0: memref<8x3xf32, #tpu.memory_space<vmem>>, %arg1: memref<16x1xf32, #tpu.memory_space<vmem>>, %arg2: memref<16x1xi32, #tpu.memory_space<vmem>>, %arg3: memref<1x16xi32, #tpu.memory_space<vmem>>, %arg4: memref<104x32xf32, #tpu.memory_space<vmem>>, %arg5: memref<8x3xf32, #tpu.memory_space<vmem>>) attributes {dimension_semantics = [], scalar_prefetch = 0 : i64, scratch_operands = 0 : i64, tpu.core_type = #tpu.core_type<tc>} {
    %c0 = arith.constant 0 : index
    %c0_0 = arith.constant 0 : index
    %0 = vector.load %arg0[%c0, %c0_0] : memref<8x3xf32, #tpu.memory_space<vmem>>, vector<8x3xf32>
    %c0_1 = arith.constant 0 : index
    %c0_2 = arith.constant 0 : index
    %1 = vector.load %arg1[%c0_1, %c0_2] : memref<16x1xf32, #tpu.memory_space<vmem>>, vector<16x1xf32>
    %c0_3 = arith.constant 0 : index
    %c0_4 = arith.constant 0 : index
    %2 = vector.load %arg2[%c0_3, %c0_4] : memref<16x1xi32, #tpu.memory_space<vmem>>, vector<16x1xi32>
    %c0_5 = arith.constant 0 : index
    %c0_6 = arith.constant 0 : index
    %3 = vector.load %arg3[%c0_5, %c0_6] : memref<1x16xi32, #tpu.memory_space<vmem>>, vector<1x16xi32>
    %c0_7 = arith.constant 0 : index
    %c0_8 = arith.constant 0 : index
    %4 = vector.load %arg4[%c0_7, %c0_8] : memref<104x32xf32, #tpu.memory_space<vmem>>, vector<3x16xf32>
    %c3 = arith.constant 3 : index
    %c0_9 = arith.constant 0 : index
    %5 = vector.load %arg4[%c3, %c0_9] : memref<104x32xf32, #tpu.memory_space<vmem>>, vector<1x16xf32>
    %c4 = arith.constant 4 : index
    %c0_10 = arith.constant 0 : index
    %6 = vector.load %arg4[%c4, %c0_10] : memref<104x32xf32, #tpu.memory_space<vmem>>, vector<1x16xf32>
    %c8 = arith.constant 8 : index
    %c0_11 = arith.constant 0 : index
    %7 = vector.load %arg4[%c8, %c0_11] : memref<104x32xf32, #tpu.memory_space<vmem>>, vector<16x32xf32>
    %c24 = arith.constant 24 : index
    %c0_12 = arith.constant 0 : index
    %8 = vector.load %arg4[%c24, %c0_12] : memref<104x32xf32, #tpu.memory_space<vmem>>, vector<1x32xf32>
    %c32 = arith.constant 32 : index
    %c0_13 = arith.constant 0 : index
    %9 = vector.load %arg4[%c32, %c0_13] : memref<104x32xf32, #tpu.memory_space<vmem>>, vector<3x16xf32>
    %c40 = arith.constant 40 : index
    %c0_14 = arith.constant 0 : index
    %10 = vector.load %arg4[%c40, %c0_14] : memref<104x32xf32, #tpu.memory_space<vmem>>, vector<32x16xf32>
    %c72 = arith.constant 72 : index
    %c0_15 = arith.constant 0 : index
    %11 = vector.load %arg4[%c72, %c0_15] : memref<104x32xf32, #tpu.memory_space<vmem>>, vector<1x16xf32>
    %c80 = arith.constant 80 : index
    %c0_16 = arith.constant 0 : index
    %12 = vector.load %arg4[%c80, %c0_16] : memref<104x32xf32, #tpu.memory_space<vmem>>, vector<16x1xf32>
    %c96 = arith.constant 96 : index
    %c0_17 = arith.constant 0 : index
    %13 = vector.load %arg4[%c96, %c0_17] : memref<104x32xf32, #tpu.memory_space<vmem>>, vector<1x1xf32>
    %14 = tpu.iota {dimensions = array<i32: 1>} : vector<16x8xi32>
    %15 = vector.broadcast %2 : vector<16x1xi32> to vector<16x8xi32>
    %16 = arith.cmpi eq, %15, %14 : vector<16x8xi32>
    %17 = arith.extui %16 : vector<16x8xi1> to vector<16x8xi32>
    %18 = arith.sitofp %17 : vector<16x8xi32> to vector<16x8xf32>
    %19 = tpu.iota {dimensions = array<i32: 0>} : vector<8x16xi32>
    %20 = vector.broadcast %3 : vector<1x16xi32> to vector<8x16xi32>
    %21 = arith.cmpi eq, %19, %20 : vector<8x16xi32>
    %22 = vector.broadcast %1 : vector<16x1xf32> to vector<16x16xf32>
    %23 = vector.broadcast %5 : vector<1x16xf32> to vector<16x16xf32>
    %24 = arith.mulf %22, %23 : vector<16x16xf32>
    %25 = vector.broadcast %6 : vector<1x16xf32> to vector<16x16xf32>
    %26 = arith.addf %24, %25 : vector<16x16xf32>
    %27 = vector.shape_cast %8 : vector<1x32xf32> to vector<1x32xf32>
    %28 = vector.broadcast %27 : vector<1x32xf32> to vector<16x32xf32>
    %29 = vector.shape_cast %11 : vector<1x16xf32> to vector<1x16xf32>
    %30 = vector.broadcast %29 : vector<1x16xf32> to vector<8x16xf32>
    %31 = vector.shape_cast %13 : vector<1x1xf32> to vector<1x1xf32>
    %32 = vector.broadcast %31 : vector<1x1xf32> to vector<8x1xf32>
    %33 = tpu.iota {dimensions = array<i32: 1>} : vector<8x3xi32>
    %c2_i32 = arith.constant 2 : i32
    %34 = vector.broadcast %c2_i32 : i32 to vector<8x3xi32>
    %35 = arith.cmpi eq, %33, %34 : vector<8x3xi32>
    %cst = arith.constant dense<0.000000e+00> : vector<16x3xf32>
    %36 = tpu.matmul %18, %0, %cst {dimension_numbers = #tpu.dot_dimension_numbers<[1], [0], [0], [1], [0, 0, 1, 1], [], []>} : vector<16x8xf32>, vector<8x3xf32>, vector<16x3xf32> -> vector<16x3xf32>
    %cst_18 = arith.constant dense<0.000000e+00> : vector<16x16xf32>
    %37 = tpu.matmul %36, %4, %cst_18 {dimension_numbers = #tpu.dot_dimension_numbers<[1], [0], [0], [1], [0, 0, 1, 1], [], []>} : vector<16x3xf32>, vector<3x16xf32>, vector<16x16xf32> -> vector<16x16xf32>
    %38 = arith.addf %37, %26 : vector<16x16xf32>
    %cst_19 = arith.constant 0.000000e+00 : f32
    %39 = vector.broadcast %cst_19 : f32 to vector<16x16xf32>
    %40 = arith.maximumf %38, %39 : vector<16x16xf32>
    %cst_20 = arith.constant dense<0.000000e+00> : vector<16x32xf32>
    %41 = tpu.matmul %40, %7, %cst_20 {dimension_numbers = #tpu.dot_dimension_numbers<[1], [0], [0], [1], [0, 0, 1, 1], [], []>} : vector<16x16xf32>, vector<16x32xf32>, vector<16x32xf32> -> vector<16x32xf32>
    %42 = arith.addf %41, %28 : vector<16x32xf32>
    %cst_21 = arith.constant 0.000000e+00 : f32
    %43 = vector.broadcast %cst_21 : f32 to vector<16x32xf32>
    %44 = arith.maximumf %42, %43 : vector<16x32xf32>
    %cst_22 = arith.constant 0.000000e+00 : f32
    %45 = vector.broadcast %cst_22 : f32 to vector<8x32xf32>
    %46 = vector.extract_strided_slice %21 {offsets = [0, 0], sizes = [8, 1], strides = [1, 1]} : vector<8x16xi1> to vector<8x1xi1>
    %47 = vector.extract_strided_slice %44 {offsets = [0, 0], sizes = [1, 32], strides = [1, 1]} : vector<16x32xf32> to vector<1x32xf32>
    %cst_23 = arith.constant 0.000000e+00 : f32
    %48 = vector.shape_cast %46 : vector<8x1xi1> to vector<8x1xi1>
    %49 = vector.broadcast %48 : vector<8x1xi1> to vector<8x32xi1>
    %50 = vector.shape_cast %47 : vector<1x32xf32> to vector<1x32xf32>
    %51 = vector.broadcast %50 : vector<1x32xf32> to vector<8x32xf32>
    %52 = vector.broadcast %cst_23 : f32 to vector<8x32xf32>
    %53 = arith.select %49, %51, %52 : vector<8x32xi1>, vector<8x32xf32>
    %54 = arith.maximumf %45, %53 : vector<8x32xf32>
    %55 = vector.extract_strided_slice %21 {offsets = [0, 1], sizes = [8, 1], strides = [1, 1]} : vector<8x16xi1> to vector<8x1xi1>
    %56 = vector.extract_strided_slice %44 {offsets = [1, 0], sizes = [1, 32], strides = [1, 1]} : vector<16x32xf32> to vector<1x32xf32>
    %cst_24 = arith.constant 0.000000e+00 : f32
    %57 = vector.shape_cast %55 : vector<8x1xi1> to vector<8x1xi1>
    %58 = vector.broadcast %57 : vector<8x1xi1> to vector<8x32xi1>
    %59 = vector.shape_cast %56 : vector<1x32xf32> to vector<1x32xf32>
    %60 = vector.broadcast %59 : vector<1x32xf32> to vector<8x32xf32>
    %61 = vector.broadcast %cst_24 : f32 to vector<8x32xf32>
    %62 = arith.select %58, %60, %61 : vector<8x32xi1>, vector<8x32xf32>
    %63 = arith.maximumf %54, %62 : vector<8x32xf32>
    %64 = vector.extract_strided_slice %21 {offsets = [0, 2], sizes = [8, 1], strides = [1, 1]} : vector<8x16xi1> to vector<8x1xi1>
    %65 = vector.extract_strided_slice %44 {offsets = [2, 0], sizes = [1, 32], strides = [1, 1]} : vector<16x32xf32> to vector<1x32xf32>
    %cst_25 = arith.constant 0.000000e+00 : f32
    %66 = vector.shape_cast %64 : vector<8x1xi1> to vector<8x1xi1>
    %67 = vector.broadcast %66 : vector<8x1xi1> to vector<8x32xi1>
    %68 = vector.shape_cast %65 : vector<1x32xf32> to vector<1x32xf32>
    %69 = vector.broadcast %68 : vector<1x32xf32> to vector<8x32xf32>
    %70 = vector.broadcast %cst_25 : f32 to vector<8x32xf32>
    %71 = arith.select %67, %69, %70 : vector<8x32xi1>, vector<8x32xf32>
    %72 = arith.maximumf %63, %71 : vector<8x32xf32>
    %73 = vector.extract_strided_slice %21 {offsets = [0, 3], sizes = [8, 1], strides = [1, 1]} : vector<8x16xi1> to vector<8x1xi1>
    %74 = vector.extract_strided_slice %44 {offsets = [3, 0], sizes = [1, 32], strides = [1, 1]} : vector<16x32xf32> to vector<1x32xf32>
    %cst_26 = arith.constant 0.000000e+00 : f32
    %75 = vector.shape_cast %73 : vector<8x1xi1> to vector<8x1xi1>
    %76 = vector.broadcast %75 : vector<8x1xi1> to vector<8x32xi1>
    %77 = vector.shape_cast %74 : vector<1x32xf32> to vector<1x32xf32>
    %78 = vector.broadcast %77 : vector<1x32xf32> to vector<8x32xf32>
    %79 = vector.broadcast %cst_26 : f32 to vector<8x32xf32>
    %80 = arith.select %76, %78, %79 : vector<8x32xi1>, vector<8x32xf32>
    %81 = arith.maximumf %72, %80 : vector<8x32xf32>
    %82 = vector.extract_strided_slice %21 {offsets = [0, 4], sizes = [8, 1], strides = [1, 1]} : vector<8x16xi1> to vector<8x1xi1>
    %83 = vector.extract_strided_slice %44 {offsets = [4, 0], sizes = [1, 32], strides = [1, 1]} : vector<16x32xf32> to vector<1x32xf32>
    %cst_27 = arith.constant 0.000000e+00 : f32
    %84 = vector.shape_cast %82 : vector<8x1xi1> to vector<8x1xi1>
    %85 = vector.broadcast %84 : vector<8x1xi1> to vector<8x32xi1>
    %86 = vector.shape_cast %83 : vector<1x32xf32> to vector<1x32xf32>
    %87 = vector.broadcast %86 : vector<1x32xf32> to vector<8x32xf32>
    %88 = vector.broadcast %cst_27 : f32 to vector<8x32xf32>
    %89 = arith.select %85, %87, %88 : vector<8x32xi1>, vector<8x32xf32>
    %90 = arith.maximumf %81, %89 : vector<8x32xf32>
    %91 = vector.extract_strided_slice %21 {offsets = [0, 5], sizes = [8, 1], strides = [1, 1]} : vector<8x16xi1> to vector<8x1xi1>
    %92 = vector.extract_strided_slice %44 {offsets = [5, 0], sizes = [1, 32], strides = [1, 1]} : vector<16x32xf32> to vector<1x32xf32>
    %cst_28 = arith.constant 0.000000e+00 : f32
    %93 = vector.shape_cast %91 : vector<8x1xi1> to vector<8x1xi1>
    %94 = vector.broadcast %93 : vector<8x1xi1> to vector<8x32xi1>
    %95 = vector.shape_cast %92 : vector<1x32xf32> to vector<1x32xf32>
    %96 = vector.broadcast %95 : vector<1x32xf32> to vector<8x32xf32>
    %97 = vector.broadcast %cst_28 : f32 to vector<8x32xf32>
    %98 = arith.select %94, %96, %97 : vector<8x32xi1>, vector<8x32xf32>
    %99 = arith.maximumf %90, %98 : vector<8x32xf32>
    %100 = vector.extract_strided_slice %21 {offsets = [0, 6], sizes = [8, 1], strides = [1, 1]} : vector<8x16xi1> to vector<8x1xi1>
    %101 = vector.extract_strided_slice %44 {offsets = [6, 0], sizes = [1, 32], strides = [1, 1]} : vector<16x32xf32> to vector<1x32xf32>
    %cst_29 = arith.constant 0.000000e+00 : f32
    %102 = vector.shape_cast %100 : vector<8x1xi1> to vector<8x1xi1>
    %103 = vector.broadcast %102 : vector<8x1xi1> to vector<8x32xi1>
    %104 = vector.shape_cast %101 : vector<1x32xf32> to vector<1x32xf32>
    %105 = vector.broadcast %104 : vector<1x32xf32> to vector<8x32xf32>
    %106 = vector.broadcast %cst_29 : f32 to vector<8x32xf32>
    %107 = arith.select %103, %105, %106 : vector<8x32xi1>, vector<8x32xf32>
    %108 = arith.maximumf %99, %107 : vector<8x32xf32>
    %109 = vector.extract_strided_slice %21 {offsets = [0, 7], sizes = [8, 1], strides = [1, 1]} : vector<8x16xi1> to vector<8x1xi1>
    %110 = vector.extract_strided_slice %44 {offsets = [7, 0], sizes = [1, 32], strides = [1, 1]} : vector<16x32xf32> to vector<1x32xf32>
    %cst_30 = arith.constant 0.000000e+00 : f32
    %111 = vector.shape_cast %109 : vector<8x1xi1> to vector<8x1xi1>
    %112 = vector.broadcast %111 : vector<8x1xi1> to vector<8x32xi1>
    %113 = vector.shape_cast %110 : vector<1x32xf32> to vector<1x32xf32>
    %114 = vector.broadcast %113 : vector<1x32xf32> to vector<8x32xf32>
    %115 = vector.broadcast %cst_30 : f32 to vector<8x32xf32>
    %116 = arith.select %112, %114, %115 : vector<8x32xi1>, vector<8x32xf32>
    %117 = arith.maximumf %108, %116 : vector<8x32xf32>
    %118 = vector.extract_strided_slice %21 {offsets = [0, 8], sizes = [8, 1], strides = [1, 1]} : vector<8x16xi1> to vector<8x1xi1>
    %119 = vector.extract_strided_slice %44 {offsets = [8, 0], sizes = [1, 32], strides = [1, 1]} : vector<16x32xf32> to vector<1x32xf32>
    %cst_31 = arith.constant 0.000000e+00 : f32
    %120 = vector.shape_cast %118 : vector<8x1xi1> to vector<8x1xi1>
    %121 = vector.broadcast %120 : vector<8x1xi1> to vector<8x32xi1>
    %122 = vector.shape_cast %119 : vector<1x32xf32> to vector<1x32xf32>
    %123 = vector.broadcast %122 : vector<1x32xf32> to vector<8x32xf32>
    %124 = vector.broadcast %cst_31 : f32 to vector<8x32xf32>
    %125 = arith.select %121, %123, %124 : vector<8x32xi1>, vector<8x32xf32>
    %126 = arith.maximumf %117, %125 : vector<8x32xf32>
    %127 = vector.extract_strided_slice %21 {offsets = [0, 9], sizes = [8, 1], strides = [1, 1]} : vector<8x16xi1> to vector<8x1xi1>
    %128 = vector.extract_strided_slice %44 {offsets = [9, 0], sizes = [1, 32], strides = [1, 1]} : vector<16x32xf32> to vector<1x32xf32>
    %cst_32 = arith.constant 0.000000e+00 : f32
    %129 = vector.shape_cast %127 : vector<8x1xi1> to vector<8x1xi1>
    %130 = vector.broadcast %129 : vector<8x1xi1> to vector<8x32xi1>
    %131 = vector.shape_cast %128 : vector<1x32xf32> to vector<1x32xf32>
    %132 = vector.broadcast %131 : vector<1x32xf32> to vector<8x32xf32>
    %133 = vector.broadcast %cst_32 : f32 to vector<8x32xf32>
    %134 = arith.select %130, %132, %133 : vector<8x32xi1>, vector<8x32xf32>
    %135 = arith.maximumf %126, %134 : vector<8x32xf32>
    %136 = vector.extract_strided_slice %21 {offsets = [0, 10], sizes = [8, 1], strides = [1, 1]} : vector<8x16xi1> to vector<8x1xi1>
    %137 = vector.extract_strided_slice %44 {offsets = [10, 0], sizes = [1, 32], strides = [1, 1]} : vector<16x32xf32> to vector<1x32xf32>
    %cst_33 = arith.constant 0.000000e+00 : f32
    %138 = vector.shape_cast %136 : vector<8x1xi1> to vector<8x1xi1>
    %139 = vector.broadcast %138 : vector<8x1xi1> to vector<8x32xi1>
    %140 = vector.shape_cast %137 : vector<1x32xf32> to vector<1x32xf32>
    %141 = vector.broadcast %140 : vector<1x32xf32> to vector<8x32xf32>
    %142 = vector.broadcast %cst_33 : f32 to vector<8x32xf32>
    %143 = arith.select %139, %141, %142 : vector<8x32xi1>, vector<8x32xf32>
    %144 = arith.maximumf %135, %143 : vector<8x32xf32>
    %145 = vector.extract_strided_slice %21 {offsets = [0, 11], sizes = [8, 1], strides = [1, 1]} : vector<8x16xi1> to vector<8x1xi1>
    %146 = vector.extract_strided_slice %44 {offsets = [11, 0], sizes = [1, 32], strides = [1, 1]} : vector<16x32xf32> to vector<1x32xf32>
    %cst_34 = arith.constant 0.000000e+00 : f32
    %147 = vector.shape_cast %145 : vector<8x1xi1> to vector<8x1xi1>
    %148 = vector.broadcast %147 : vector<8x1xi1> to vector<8x32xi1>
    %149 = vector.shape_cast %146 : vector<1x32xf32> to vector<1x32xf32>
    %150 = vector.broadcast %149 : vector<1x32xf32> to vector<8x32xf32>
    %151 = vector.broadcast %cst_34 : f32 to vector<8x32xf32>
    %152 = arith.select %148, %150, %151 : vector<8x32xi1>, vector<8x32xf32>
    %153 = arith.maximumf %144, %152 : vector<8x32xf32>
    %154 = vector.extract_strided_slice %21 {offsets = [0, 12], sizes = [8, 1], strides = [1, 1]} : vector<8x16xi1> to vector<8x1xi1>
    %155 = vector.extract_strided_slice %44 {offsets = [12, 0], sizes = [1, 32], strides = [1, 1]} : vector<16x32xf32> to vector<1x32xf32>
    %cst_35 = arith.constant 0.000000e+00 : f32
    %156 = vector.shape_cast %154 : vector<8x1xi1> to vector<8x1xi1>
    %157 = vector.broadcast %156 : vector<8x1xi1> to vector<8x32xi1>
    %158 = vector.shape_cast %155 : vector<1x32xf32> to vector<1x32xf32>
    %159 = vector.broadcast %158 : vector<1x32xf32> to vector<8x32xf32>
    %160 = vector.broadcast %cst_35 : f32 to vector<8x32xf32>
    %161 = arith.select %157, %159, %160 : vector<8x32xi1>, vector<8x32xf32>
    %162 = arith.maximumf %153, %161 : vector<8x32xf32>
    %163 = vector.extract_strided_slice %21 {offsets = [0, 13], sizes = [8, 1], strides = [1, 1]} : vector<8x16xi1> to vector<8x1xi1>
    %164 = vector.extract_strided_slice %44 {offsets = [13, 0], sizes = [1, 32], strides = [1, 1]} : vector<16x32xf32> to vector<1x32xf32>
    %cst_36 = arith.constant 0.000000e+00 : f32
    %165 = vector.shape_cast %163 : vector<8x1xi1> to vector<8x1xi1>
    %166 = vector.broadcast %165 : vector<8x1xi1> to vector<8x32xi1>
    %167 = vector.shape_cast %164 : vector<1x32xf32> to vector<1x32xf32>
    %168 = vector.broadcast %167 : vector<1x32xf32> to vector<8x32xf32>
    %169 = vector.broadcast %cst_36 : f32 to vector<8x32xf32>
    %170 = arith.select %166, %168, %169 : vector<8x32xi1>, vector<8x32xf32>
    %171 = arith.maximumf %162, %170 : vector<8x32xf32>
    %172 = vector.extract_strided_slice %21 {offsets = [0, 14], sizes = [8, 1], strides = [1, 1]} : vector<8x16xi1> to vector<8x1xi1>
    %173 = vector.extract_strided_slice %44 {offsets = [14, 0], sizes = [1, 32], strides = [1, 1]} : vector<16x32xf32> to vector<1x32xf32>
    %cst_37 = arith.constant 0.000000e+00 : f32
    %174 = vector.shape_cast %172 : vector<8x1xi1> to vector<8x1xi1>
    %175 = vector.broadcast %174 : vector<8x1xi1> to vector<8x32xi1>
    %176 = vector.shape_cast %173 : vector<1x32xf32> to vector<1x32xf32>
    %177 = vector.broadcast %176 : vector<1x32xf32> to vector<8x32xf32>
    %178 = vector.broadcast %cst_37 : f32 to vector<8x32xf32>
    %179 = arith.select %175, %177, %178 : vector<8x32xi1>, vector<8x32xf32>
    %180 = arith.maximumf %171, %179 : vector<8x32xf32>
    %181 = vector.extract_strided_slice %21 {offsets = [0, 15], sizes = [8, 1], strides = [1, 1]} : vector<8x16xi1> to vector<8x1xi1>
    %182 = vector.extract_strided_slice %44 {offsets = [15, 0], sizes = [1, 32], strides = [1, 1]} : vector<16x32xf32> to vector<1x32xf32>
    %cst_38 = arith.constant 0.000000e+00 : f32
    %183 = vector.shape_cast %181 : vector<8x1xi1> to vector<8x1xi1>
    %184 = vector.broadcast %183 : vector<8x1xi1> to vector<8x32xi1>
    %185 = vector.shape_cast %182 : vector<1x32xf32> to vector<1x32xf32>
    %186 = vector.broadcast %185 : vector<1x32xf32> to vector<8x32xf32>
    %187 = vector.broadcast %cst_38 : f32 to vector<8x32xf32>
    %188 = arith.select %184, %186, %187 : vector<8x32xi1>, vector<8x32xf32>
    %189 = arith.maximumf %180, %188 : vector<8x32xf32>
    %cst_39 = arith.constant dense<0.000000e+00> : vector<8x16xf32>
    %190 = tpu.matmul %0, %9, %cst_39 {dimension_numbers = #tpu.dot_dimension_numbers<[1], [0], [0], [1], [0, 0, 1, 1], [], []>} : vector<8x3xf32>, vector<3x16xf32>, vector<8x16xf32> -> vector<8x16xf32>
    %cst_40 = arith.constant dense<0.000000e+00> : vector<8x16xf32>
    %191 = tpu.matmul %189, %10, %cst_40 {dimension_numbers = #tpu.dot_dimension_numbers<[1], [0], [0], [1], [0, 0, 1, 1], [], []>} : vector<8x32xf32>, vector<32x16xf32>, vector<8x16xf32> -> vector<8x16xf32>
    %192 = arith.addf %190, %191 : vector<8x16xf32>
    %193 = arith.addf %192, %30 : vector<8x16xf32>
    %cst_41 = arith.constant 0.000000e+00 : f32
    %194 = vector.broadcast %cst_41 : f32 to vector<8x16xf32>
    %195 = arith.maximumf %193, %194 : vector<8x16xf32>
    %cst_42 = arith.constant dense<0.000000e+00> : vector<8x1xf32>
    %196 = tpu.matmul %195, %12, %cst_42 {dimension_numbers = #tpu.dot_dimension_numbers<[1], [0], [0], [1], [0, 0, 1, 1], [], []>} : vector<8x16xf32>, vector<16x1xf32>, vector<8x1xf32> -> vector<8x1xf32>
    %197 = arith.addf %196, %32 : vector<8x1xf32>
    %198 = arith.negf %197 : vector<8x1xf32>
    %199 = math.exp %198 : vector<8x1xf32>
    %cst_43 = arith.constant 1.000000e+00 : f32
    %200 = vector.broadcast %cst_43 : f32 to vector<8x1xf32>
    %201 = arith.addf %200, %199 : vector<8x1xf32>
    %202 = arith.divf %200, %201 : vector<8x1xf32>
    %203 = vector.shape_cast %202 : vector<8x1xf32> to vector<8x1xf32>
    %204 = vector.broadcast %203 : vector<8x1xf32> to vector<8x3xf32>
    %205 = arith.select %35, %204, %0 : vector<8x3xi1>, vector<8x3xf32>
    %cst_44 = arith.constant dense<0.000000e+00> : vector<16x3xf32>
    %206 = tpu.matmul %18, %205, %cst_44 {dimension_numbers = #tpu.dot_dimension_numbers<[1], [0], [0], [1], [0, 0, 1, 1], [], []>} : vector<16x8xf32>, vector<8x3xf32>, vector<16x3xf32> -> vector<16x3xf32>
    %cst_45 = arith.constant dense<0.000000e+00> : vector<16x16xf32>
    %207 = tpu.matmul %206, %4, %cst_45 {dimension_numbers = #tpu.dot_dimension_numbers<[1], [0], [0], [1], [0, 0, 1, 1], [], []>} : vector<16x3xf32>, vector<3x16xf32>, vector<16x16xf32> -> vector<16x16xf32>
    %208 = arith.addf %207, %26 : vector<16x16xf32>
    %cst_46 = arith.constant 0.000000e+00 : f32
    %209 = vector.broadcast %cst_46 : f32 to vector<16x16xf32>
    %210 = arith.maximumf %208, %209 : vector<16x16xf32>
    %cst_47 = arith.constant dense<0.000000e+00> : vector<16x32xf32>
    %211 = tpu.matmul %210, %7, %cst_47 {dimension_numbers = #tpu.dot_dimension_numbers<[1], [0], [0], [1], [0, 0, 1, 1], [], []>} : vector<16x16xf32>, vector<16x32xf32>, vector<16x32xf32> -> vector<16x32xf32>
    %212 = arith.addf %211, %28 : vector<16x32xf32>
    %cst_48 = arith.constant 0.000000e+00 : f32
    %213 = vector.broadcast %cst_48 : f32 to vector<16x32xf32>
    %214 = arith.maximumf %212, %213 : vector<16x32xf32>
    %cst_49 = arith.constant 0.000000e+00 : f32
    %215 = vector.broadcast %cst_49 : f32 to vector<8x32xf32>
    %216 = vector.extract_strided_slice %21 {offsets = [0, 0], sizes = [8, 1], strides = [1, 1]} : vector<8x16xi1> to vector<8x1xi1>
    %217 = vector.extract_strided_slice %214 {offsets = [0, 0], sizes = [1, 32], strides = [1, 1]} : vector<16x32xf32> to vector<1x32xf32>
    %cst_50 = arith.constant 0.000000e+00 : f32
    %218 = vector.shape_cast %216 : vector<8x1xi1> to vector<8x1xi1>
    %219 = vector.broadcast %218 : vector<8x1xi1> to vector<8x32xi1>
    %220 = vector.shape_cast %217 : vector<1x32xf32> to vector<1x32xf32>
    %221 = vector.broadcast %220 : vector<1x32xf32> to vector<8x32xf32>
    %222 = vector.broadcast %cst_50 : f32 to vector<8x32xf32>
    %223 = arith.select %219, %221, %222 : vector<8x32xi1>, vector<8x32xf32>
    %224 = arith.maximumf %215, %223 : vector<8x32xf32>
    %225 = vector.extract_strided_slice %21 {offsets = [0, 1], sizes = [8, 1], strides = [1, 1]} : vector<8x16xi1> to vector<8x1xi1>
    %226 = vector.extract_strided_slice %214 {offsets = [1, 0], sizes = [1, 32], strides = [1, 1]} : vector<16x32xf32> to vector<1x32xf32>
    %cst_51 = arith.constant 0.000000e+00 : f32
    %227 = vector.shape_cast %225 : vector<8x1xi1> to vector<8x1xi1>
    %228 = vector.broadcast %227 : vector<8x1xi1> to vector<8x32xi1>
    %229 = vector.shape_cast %226 : vector<1x32xf32> to vector<1x32xf32>
    %230 = vector.broadcast %229 : vector<1x32xf32> to vector<8x32xf32>
    %231 = vector.broadcast %cst_51 : f32 to vector<8x32xf32>
    %232 = arith.select %228, %230, %231 : vector<8x32xi1>, vector<8x32xf32>
    %233 = arith.maximumf %224, %232 : vector<8x32xf32>
    %234 = vector.extract_strided_slice %21 {offsets = [0, 2], sizes = [8, 1], strides = [1, 1]} : vector<8x16xi1> to vector<8x1xi1>
    %235 = vector.extract_strided_slice %214 {offsets = [2, 0], sizes = [1, 32], strides = [1, 1]} : vector<16x32xf32> to vector<1x32xf32>
    %cst_52 = arith.constant 0.000000e+00 : f32
    %236 = vector.shape_cast %234 : vector<8x1xi1> to vector<8x1xi1>
    %237 = vector.broadcast %236 : vector<8x1xi1> to vector<8x32xi1>
    %238 = vector.shape_cast %235 : vector<1x32xf32> to vector<1x32xf32>
    %239 = vector.broadcast %238 : vector<1x32xf32> to vector<8x32xf32>
    %240 = vector.broadcast %cst_52 : f32 to vector<8x32xf32>
    %241 = arith.select %237, %239, %240 : vector<8x32xi1>, vector<8x32xf32>
    %242 = arith.maximumf %233, %241 : vector<8x32xf32>
    %243 = vector.extract_strided_slice %21 {offsets = [0, 3], sizes = [8, 1], strides = [1, 1]} : vector<8x16xi1> to vector<8x1xi1>
    %244 = vector.extract_strided_slice %214 {offsets = [3, 0], sizes = [1, 32], strides = [1, 1]} : vector<16x32xf32> to vector<1x32xf32>
    %cst_53 = arith.constant 0.000000e+00 : f32
    %245 = vector.shape_cast %243 : vector<8x1xi1> to vector<8x1xi1>
    %246 = vector.broadcast %245 : vector<8x1xi1> to vector<8x32xi1>
    %247 = vector.shape_cast %244 : vector<1x32xf32> to vector<1x32xf32>
    %248 = vector.broadcast %247 : vector<1x32xf32> to vector<8x32xf32>
    %249 = vector.broadcast %cst_53 : f32 to vector<8x32xf32>
    %250 = arith.select %246, %248, %249 : vector<8x32xi1>, vector<8x32xf32>
    %251 = arith.maximumf %242, %250 : vector<8x32xf32>
    %252 = vector.extract_strided_slice %21 {offsets = [0, 4], sizes = [8, 1], strides = [1, 1]} : vector<8x16xi1> to vector<8x1xi1>
    %253 = vector.extract_strided_slice %214 {offsets = [4, 0], sizes = [1, 32], strides = [1, 1]} : vector<16x32xf32> to vector<1x32xf32>
    %cst_54 = arith.constant 0.000000e+00 : f32
    %254 = vector.shape_cast %252 : vector<8x1xi1> to vector<8x1xi1>
    %255 = vector.broadcast %254 : vector<8x1xi1> to vector<8x32xi1>
    %256 = vector.shape_cast %253 : vector<1x32xf32> to vector<1x32xf32>
    %257 = vector.broadcast %256 : vector<1x32xf32> to vector<8x32xf32>
    %258 = vector.broadcast %cst_54 : f32 to vector<8x32xf32>
    %259 = arith.select %255, %257, %258 : vector<8x32xi1>, vector<8x32xf32>
    %260 = arith.maximumf %251, %259 : vector<8x32xf32>
    %261 = vector.extract_strided_slice %21 {offsets = [0, 5], sizes = [8, 1], strides = [1, 1]} : vector<8x16xi1> to vector<8x1xi1>
    %262 = vector.extract_strided_slice %214 {offsets = [5, 0], sizes = [1, 32], strides = [1, 1]} : vector<16x32xf32> to vector<1x32xf32>
    %cst_55 = arith.constant 0.000000e+00 : f32
    %263 = vector.shape_cast %261 : vector<8x1xi1> to vector<8x1xi1>
    %264 = vector.broadcast %263 : vector<8x1xi1> to vector<8x32xi1>
    %265 = vector.shape_cast %262 : vector<1x32xf32> to vector<1x32xf32>
    %266 = vector.broadcast %265 : vector<1x32xf32> to vector<8x32xf32>
    %267 = vector.broadcast %cst_55 : f32 to vector<8x32xf32>
    %268 = arith.select %264, %266, %267 : vector<8x32xi1>, vector<8x32xf32>
    %269 = arith.maximumf %260, %268 : vector<8x32xf32>
    %270 = vector.extract_strided_slice %21 {offsets = [0, 6], sizes = [8, 1], strides = [1, 1]} : vector<8x16xi1> to vector<8x1xi1>
    %271 = vector.extract_strided_slice %214 {offsets = [6, 0], sizes = [1, 32], strides = [1, 1]} : vector<16x32xf32> to vector<1x32xf32>
    %cst_56 = arith.constant 0.000000e+00 : f32
    %272 = vector.shape_cast %270 : vector<8x1xi1> to vector<8x1xi1>
    %273 = vector.broadcast %272 : vector<8x1xi1> to vector<8x32xi1>
    %274 = vector.shape_cast %271 : vector<1x32xf32> to vector<1x32xf32>
    %275 = vector.broadcast %274 : vector<1x32xf32> to vector<8x32xf32>
    %276 = vector.broadcast %cst_56 : f32 to vector<8x32xf32>
    %277 = arith.select %273, %275, %276 : vector<8x32xi1>, vector<8x32xf32>
    %278 = arith.maximumf %269, %277 : vector<8x32xf32>
    %279 = vector.extract_strided_slice %21 {offsets = [0, 7], sizes = [8, 1], strides = [1, 1]} : vector<8x16xi1> to vector<8x1xi1>
    %280 = vector.extract_strided_slice %214 {offsets = [7, 0], sizes = [1, 32], strides = [1, 1]} : vector<16x32xf32> to vector<1x32xf32>
    %cst_57 = arith.constant 0.000000e+00 : f32
    %281 = vector.shape_cast %279 : vector<8x1xi1> to vector<8x1xi1>
    %282 = vector.broadcast %281 : vector<8x1xi1> to vector<8x32xi1>
    %283 = vector.shape_cast %280 : vector<1x32xf32> to vector<1x32xf32>
    %284 = vector.broadcast %283 : vector<1x32xf32> to vector<8x32xf32>
    %285 = vector.broadcast %cst_57 : f32 to vector<8x32xf32>
    %286 = arith.select %282, %284, %285 : vector<8x32xi1>, vector<8x32xf32>
    %287 = arith.maximumf %278, %286 : vector<8x32xf32>
    %288 = vector.extract_strided_slice %21 {offsets = [0, 8], sizes = [8, 1], strides = [1, 1]} : vector<8x16xi1> to vector<8x1xi1>
    %289 = vector.extract_strided_slice %214 {offsets = [8, 0], sizes = [1, 32], strides = [1, 1]} : vector<16x32xf32> to vector<1x32xf32>
    %cst_58 = arith.constant 0.000000e+00 : f32
    %290 = vector.shape_cast %288 : vector<8x1xi1> to vector<8x1xi1>
    %291 = vector.broadcast %290 : vector<8x1xi1> to vector<8x32xi1>
    %292 = vector.shape_cast %289 : vector<1x32xf32> to vector<1x32xf32>
    %293 = vector.broadcast %292 : vector<1x32xf32> to vector<8x32xf32>
    %294 = vector.broadcast %cst_58 : f32 to vector<8x32xf32>
    %295 = arith.select %291, %293, %294 : vector<8x32xi1>, vector<8x32xf32>
    %296 = arith.maximumf %287, %295 : vector<8x32xf32>
    %297 = vector.extract_strided_slice %21 {offsets = [0, 9], sizes = [8, 1], strides = [1, 1]} : vector<8x16xi1> to vector<8x1xi1>
    %298 = vector.extract_strided_slice %214 {offsets = [9, 0], sizes = [1, 32], strides = [1, 1]} : vector<16x32xf32> to vector<1x32xf32>
    %cst_59 = arith.constant 0.000000e+00 : f32
    %299 = vector.shape_cast %297 : vector<8x1xi1> to vector<8x1xi1>
    %300 = vector.broadcast %299 : vector<8x1xi1> to vector<8x32xi1>
    %301 = vector.shape_cast %298 : vector<1x32xf32> to vector<1x32xf32>
    %302 = vector.broadcast %301 : vector<1x32xf32> to vector<8x32xf32>
    %303 = vector.broadcast %cst_59 : f32 to vector<8x32xf32>
    %304 = arith.select %300, %302, %303 : vector<8x32xi1>, vector<8x32xf32>
    %305 = arith.maximumf %296, %304 : vector<8x32xf32>
    %306 = vector.extract_strided_slice %21 {offsets = [0, 10], sizes = [8, 1], strides = [1, 1]} : vector<8x16xi1> to vector<8x1xi1>
    %307 = vector.extract_strided_slice %214 {offsets = [10, 0], sizes = [1, 32], strides = [1, 1]} : vector<16x32xf32> to vector<1x32xf32>
    %cst_60 = arith.constant 0.000000e+00 : f32
    %308 = vector.shape_cast %306 : vector<8x1xi1> to vector<8x1xi1>
    %309 = vector.broadcast %308 : vector<8x1xi1> to vector<8x32xi1>
    %310 = vector.shape_cast %307 : vector<1x32xf32> to vector<1x32xf32>
    %311 = vector.broadcast %310 : vector<1x32xf32> to vector<8x32xf32>
    %312 = vector.broadcast %cst_60 : f32 to vector<8x32xf32>
    %313 = arith.select %309, %311, %312 : vector<8x32xi1>, vector<8x32xf32>
    %314 = arith.maximumf %305, %313 : vector<8x32xf32>
    %315 = vector.extract_strided_slice %21 {offsets = [0, 11], sizes = [8, 1], strides = [1, 1]} : vector<8x16xi1> to vector<8x1xi1>
    %316 = vector.extract_strided_slice %214 {offsets = [11, 0], sizes = [1, 32], strides = [1, 1]} : vector<16x32xf32> to vector<1x32xf32>
    %cst_61 = arith.constant 0.000000e+00 : f32
    %317 = vector.shape_cast %315 : vector<8x1xi1> to vector<8x1xi1>
    %318 = vector.broadcast %317 : vector<8x1xi1> to vector<8x32xi1>
    %319 = vector.shape_cast %316 : vector<1x32xf32> to vector<1x32xf32>
    %320 = vector.broadcast %319 : vector<1x32xf32> to vector<8x32xf32>
    %321 = vector.broadcast %cst_61 : f32 to vector<8x32xf32>
    %322 = arith.select %318, %320, %321 : vector<8x32xi1>, vector<8x32xf32>
    %323 = arith.maximumf %314, %322 : vector<8x32xf32>
    %324 = vector.extract_strided_slice %21 {offsets = [0, 12], sizes = [8, 1], strides = [1, 1]} : vector<8x16xi1> to vector<8x1xi1>
    %325 = vector.extract_strided_slice %214 {offsets = [12, 0], sizes = [1, 32], strides = [1, 1]} : vector<16x32xf32> to vector<1x32xf32>
    %cst_62 = arith.constant 0.000000e+00 : f32
    %326 = vector.shape_cast %324 : vector<8x1xi1> to vector<8x1xi1>
    %327 = vector.broadcast %326 : vector<8x1xi1> to vector<8x32xi1>
    %328 = vector.shape_cast %325 : vector<1x32xf32> to vector<1x32xf32>
    %329 = vector.broadcast %328 : vector<1x32xf32> to vector<8x32xf32>
    %330 = vector.broadcast %cst_62 : f32 to vector<8x32xf32>
    %331 = arith.select %327, %329, %330 : vector<8x32xi1>, vector<8x32xf32>
    %332 = arith.maximumf %323, %331 : vector<8x32xf32>
    %333 = vector.extract_strided_slice %21 {offsets = [0, 13], sizes = [8, 1], strides = [1, 1]} : vector<8x16xi1> to vector<8x1xi1>
    %334 = vector.extract_strided_slice %214 {offsets = [13, 0], sizes = [1, 32], strides = [1, 1]} : vector<16x32xf32> to vector<1x32xf32>
    %cst_63 = arith.constant 0.000000e+00 : f32
    %335 = vector.shape_cast %333 : vector<8x1xi1> to vector<8x1xi1>
    %336 = vector.broadcast %335 : vector<8x1xi1> to vector<8x32xi1>
    %337 = vector.shape_cast %334 : vector<1x32xf32> to vector<1x32xf32>
    %338 = vector.broadcast %337 : vector<1x32xf32> to vector<8x32xf32>
    %339 = vector.broadcast %cst_63 : f32 to vector<8x32xf32>
    %340 = arith.select %336, %338, %339 : vector<8x32xi1>, vector<8x32xf32>
    %341 = arith.maximumf %332, %340 : vector<8x32xf32>
    %342 = vector.extract_strided_slice %21 {offsets = [0, 14], sizes = [8, 1], strides = [1, 1]} : vector<8x16xi1> to vector<8x1xi1>
    %343 = vector.extract_strided_slice %214 {offsets = [14, 0], sizes = [1, 32], strides = [1, 1]} : vector<16x32xf32> to vector<1x32xf32>
    %cst_64 = arith.constant 0.000000e+00 : f32
    %344 = vector.shape_cast %342 : vector<8x1xi1> to vector<8x1xi1>
    %345 = vector.broadcast %344 : vector<8x1xi1> to vector<8x32xi1>
    %346 = vector.shape_cast %343 : vector<1x32xf32> to vector<1x32xf32>
    %347 = vector.broadcast %346 : vector<1x32xf32> to vector<8x32xf32>
    %348 = vector.broadcast %cst_64 : f32 to vector<8x32xf32>
    %349 = arith.select %345, %347, %348 : vector<8x32xi1>, vector<8x32xf32>
    %350 = arith.maximumf %341, %349 : vector<8x32xf32>
    %351 = vector.extract_strided_slice %21 {offsets = [0, 15], sizes = [8, 1], strides = [1, 1]} : vector<8x16xi1> to vector<8x1xi1>
    %352 = vector.extract_strided_slice %214 {offsets = [15, 0], sizes = [1, 32], strides = [1, 1]} : vector<16x32xf32> to vector<1x32xf32>
    %cst_65 = arith.constant 0.000000e+00 : f32
    %353 = vector.shape_cast %351 : vector<8x1xi1> to vector<8x1xi1>
    %354 = vector.broadcast %353 : vector<8x1xi1> to vector<8x32xi1>
    %355 = vector.shape_cast %352 : vector<1x32xf32> to vector<1x32xf32>
    %356 = vector.broadcast %355 : vector<1x32xf32> to vector<8x32xf32>
    %357 = vector.broadcast %cst_65 : f32 to vector<8x32xf32>
    %358 = arith.select %354, %356, %357 : vector<8x32xi1>, vector<8x32xf32>
    %359 = arith.maximumf %350, %358 : vector<8x32xf32>
    %cst_66 = arith.constant dense<0.000000e+00> : vector<8x16xf32>
    %360 = tpu.matmul %205, %9, %cst_66 {dimension_numbers = #tpu.dot_dimension_numbers<[1], [0], [0], [1], [0, 0, 1, 1], [], []>} : vector<8x3xf32>, vector<3x16xf32>, vector<8x16xf32> -> vector<8x16xf32>
    %cst_67 = arith.constant dense<0.000000e+00> : vector<8x16xf32>
    %361 = tpu.matmul %359, %10, %cst_67 {dimension_numbers = #tpu.dot_dimension_numbers<[1], [0], [0], [1], [0, 0, 1, 1], [], []>} : vector<8x32xf32>, vector<32x16xf32>, vector<8x16xf32> -> vector<8x16xf32>
    %362 = arith.addf %360, %361 : vector<8x16xf32>
    %363 = arith.addf %362, %30 : vector<8x16xf32>
    %cst_68 = arith.constant 0.000000e+00 : f32
    %364 = vector.broadcast %cst_68 : f32 to vector<8x16xf32>
    %365 = arith.maximumf %363, %364 : vector<8x16xf32>
    %cst_69 = arith.constant dense<0.000000e+00> : vector<8x1xf32>
    %366 = tpu.matmul %365, %12, %cst_69 {dimension_numbers = #tpu.dot_dimension_numbers<[1], [0], [0], [1], [0, 0, 1, 1], [], []>} : vector<8x16xf32>, vector<16x1xf32>, vector<8x1xf32> -> vector<8x1xf32>
    %367 = arith.addf %366, %32 : vector<8x1xf32>
    %368 = arith.negf %367 : vector<8x1xf32>
    %369 = math.exp %368 : vector<8x1xf32>
    %cst_70 = arith.constant 1.000000e+00 : f32
    %370 = vector.broadcast %cst_70 : f32 to vector<8x1xf32>
    %371 = arith.addf %370, %369 : vector<8x1xf32>
    %372 = arith.divf %370, %371 : vector<8x1xf32>
    %373 = vector.shape_cast %372 : vector<8x1xf32> to vector<8x1xf32>
    %374 = vector.broadcast %373 : vector<8x1xf32> to vector<8x3xf32>
    %375 = arith.select %35, %374, %205 : vector<8x3xi1>, vector<8x3xf32>
    %cst_71 = arith.constant dense<0.000000e+00> : vector<16x3xf32>
    %376 = tpu.matmul %18, %375, %cst_71 {dimension_numbers = #tpu.dot_dimension_numbers<[1], [0], [0], [1], [0, 0, 1, 1], [], []>} : vector<16x8xf32>, vector<8x3xf32>, vector<16x3xf32> -> vector<16x3xf32>
    %cst_72 = arith.constant dense<0.000000e+00> : vector<16x16xf32>
    %377 = tpu.matmul %376, %4, %cst_72 {dimension_numbers = #tpu.dot_dimension_numbers<[1], [0], [0], [1], [0, 0, 1, 1], [], []>} : vector<16x3xf32>, vector<3x16xf32>, vector<16x16xf32> -> vector<16x16xf32>
    %378 = arith.addf %377, %26 : vector<16x16xf32>
    %cst_73 = arith.constant 0.000000e+00 : f32
    %379 = vector.broadcast %cst_73 : f32 to vector<16x16xf32>
    %380 = arith.maximumf %378, %379 : vector<16x16xf32>
    %cst_74 = arith.constant dense<0.000000e+00> : vector<16x32xf32>
    %381 = tpu.matmul %380, %7, %cst_74 {dimension_numbers = #tpu.dot_dimension_numbers<[1], [0], [0], [1], [0, 0, 1, 1], [], []>} : vector<16x16xf32>, vector<16x32xf32>, vector<16x32xf32> -> vector<16x32xf32>
    %382 = arith.addf %381, %28 : vector<16x32xf32>
    %cst_75 = arith.constant 0.000000e+00 : f32
    %383 = vector.broadcast %cst_75 : f32 to vector<16x32xf32>
    %384 = arith.maximumf %382, %383 : vector<16x32xf32>
    %cst_76 = arith.constant 0.000000e+00 : f32
    %385 = vector.broadcast %cst_76 : f32 to vector<8x32xf32>
    %386 = vector.extract_strided_slice %21 {offsets = [0, 0], sizes = [8, 1], strides = [1, 1]} : vector<8x16xi1> to vector<8x1xi1>
    %387 = vector.extract_strided_slice %384 {offsets = [0, 0], sizes = [1, 32], strides = [1, 1]} : vector<16x32xf32> to vector<1x32xf32>
    %cst_77 = arith.constant 0.000000e+00 : f32
    %388 = vector.shape_cast %386 : vector<8x1xi1> to vector<8x1xi1>
    %389 = vector.broadcast %388 : vector<8x1xi1> to vector<8x32xi1>
    %390 = vector.shape_cast %387 : vector<1x32xf32> to vector<1x32xf32>
    %391 = vector.broadcast %390 : vector<1x32xf32> to vector<8x32xf32>
    %392 = vector.broadcast %cst_77 : f32 to vector<8x32xf32>
    %393 = arith.select %389, %391, %392 : vector<8x32xi1>, vector<8x32xf32>
    %394 = arith.maximumf %385, %393 : vector<8x32xf32>
    %395 = vector.extract_strided_slice %21 {offsets = [0, 1], sizes = [8, 1], strides = [1, 1]} : vector<8x16xi1> to vector<8x1xi1>
    %396 = vector.extract_strided_slice %384 {offsets = [1, 0], sizes = [1, 32], strides = [1, 1]} : vector<16x32xf32> to vector<1x32xf32>
    %cst_78 = arith.constant 0.000000e+00 : f32
    %397 = vector.shape_cast %395 : vector<8x1xi1> to vector<8x1xi1>
    %398 = vector.broadcast %397 : vector<8x1xi1> to vector<8x32xi1>
    %399 = vector.shape_cast %396 : vector<1x32xf32> to vector<1x32xf32>
    %400 = vector.broadcast %399 : vector<1x32xf32> to vector<8x32xf32>
    %401 = vector.broadcast %cst_78 : f32 to vector<8x32xf32>
    %402 = arith.select %398, %400, %401 : vector<8x32xi1>, vector<8x32xf32>
    %403 = arith.maximumf %394, %402 : vector<8x32xf32>
    %404 = vector.extract_strided_slice %21 {offsets = [0, 2], sizes = [8, 1], strides = [1, 1]} : vector<8x16xi1> to vector<8x1xi1>
    %405 = vector.extract_strided_slice %384 {offsets = [2, 0], sizes = [1, 32], strides = [1, 1]} : vector<16x32xf32> to vector<1x32xf32>
    %cst_79 = arith.constant 0.000000e+00 : f32
    %406 = vector.shape_cast %404 : vector<8x1xi1> to vector<8x1xi1>
    %407 = vector.broadcast %406 : vector<8x1xi1> to vector<8x32xi1>
    %408 = vector.shape_cast %405 : vector<1x32xf32> to vector<1x32xf32>
    %409 = vector.broadcast %408 : vector<1x32xf32> to vector<8x32xf32>
    %410 = vector.broadcast %cst_79 : f32 to vector<8x32xf32>
    %411 = arith.select %407, %409, %410 : vector<8x32xi1>, vector<8x32xf32>
    %412 = arith.maximumf %403, %411 : vector<8x32xf32>
    %413 = vector.extract_strided_slice %21 {offsets = [0, 3], sizes = [8, 1], strides = [1, 1]} : vector<8x16xi1> to vector<8x1xi1>
    %414 = vector.extract_strided_slice %384 {offsets = [3, 0], sizes = [1, 32], strides = [1, 1]} : vector<16x32xf32> to vector<1x32xf32>
    %cst_80 = arith.constant 0.000000e+00 : f32
    %415 = vector.shape_cast %413 : vector<8x1xi1> to vector<8x1xi1>
    %416 = vector.broadcast %415 : vector<8x1xi1> to vector<8x32xi1>
    %417 = vector.shape_cast %414 : vector<1x32xf32> to vector<1x32xf32>
    %418 = vector.broadcast %417 : vector<1x32xf32> to vector<8x32xf32>
    %419 = vector.broadcast %cst_80 : f32 to vector<8x32xf32>
    %420 = arith.select %416, %418, %419 : vector<8x32xi1>, vector<8x32xf32>
    %421 = arith.maximumf %412, %420 : vector<8x32xf32>
    %422 = vector.extract_strided_slice %21 {offsets = [0, 4], sizes = [8, 1], strides = [1, 1]} : vector<8x16xi1> to vector<8x1xi1>
    %423 = vector.extract_strided_slice %384 {offsets = [4, 0], sizes = [1, 32], strides = [1, 1]} : vector<16x32xf32> to vector<1x32xf32>
    %cst_81 = arith.constant 0.000000e+00 : f32
    %424 = vector.shape_cast %422 : vector<8x1xi1> to vector<8x1xi1>
    %425 = vector.broadcast %424 : vector<8x1xi1> to vector<8x32xi1>
    %426 = vector.shape_cast %423 : vector<1x32xf32> to vector<1x32xf32>
    %427 = vector.broadcast %426 : vector<1x32xf32> to vector<8x32xf32>
    %428 = vector.broadcast %cst_81 : f32 to vector<8x32xf32>
    %429 = arith.select %425, %427, %428 : vector<8x32xi1>, vector<8x32xf32>
    %430 = arith.maximumf %421, %429 : vector<8x32xf32>
    %431 = vector.extract_strided_slice %21 {offsets = [0, 5], sizes = [8, 1], strides = [1, 1]} : vector<8x16xi1> to vector<8x1xi1>
    %432 = vector.extract_strided_slice %384 {offsets = [5, 0], sizes = [1, 32], strides = [1, 1]} : vector<16x32xf32> to vector<1x32xf32>
    %cst_82 = arith.constant 0.000000e+00 : f32
    %433 = vector.shape_cast %431 : vector<8x1xi1> to vector<8x1xi1>
    %434 = vector.broadcast %433 : vector<8x1xi1> to vector<8x32xi1>
    %435 = vector.shape_cast %432 : vector<1x32xf32> to vector<1x32xf32>
    %436 = vector.broadcast %435 : vector<1x32xf32> to vector<8x32xf32>
    %437 = vector.broadcast %cst_82 : f32 to vector<8x32xf32>
    %438 = arith.select %434, %436, %437 : vector<8x32xi1>, vector<8x32xf32>
    %439 = arith.maximumf %430, %438 : vector<8x32xf32>
    %440 = vector.extract_strided_slice %21 {offsets = [0, 6], sizes = [8, 1], strides = [1, 1]} : vector<8x16xi1> to vector<8x1xi1>
    %441 = vector.extract_strided_slice %384 {offsets = [6, 0], sizes = [1, 32], strides = [1, 1]} : vector<16x32xf32> to vector<1x32xf32>
    %cst_83 = arith.constant 0.000000e+00 : f32
    %442 = vector.shape_cast %440 : vector<8x1xi1> to vector<8x1xi1>
    %443 = vector.broadcast %442 : vector<8x1xi1> to vector<8x32xi1>
    %444 = vector.shape_cast %441 : vector<1x32xf32> to vector<1x32xf32>
    %445 = vector.broadcast %444 : vector<1x32xf32> to vector<8x32xf32>
    %446 = vector.broadcast %cst_83 : f32 to vector<8x32xf32>
    %447 = arith.select %443, %445, %446 : vector<8x32xi1>, vector<8x32xf32>
    %448 = arith.maximumf %439, %447 : vector<8x32xf32>
    %449 = vector.extract_strided_slice %21 {offsets = [0, 7], sizes = [8, 1], strides = [1, 1]} : vector<8x16xi1> to vector<8x1xi1>
    %450 = vector.extract_strided_slice %384 {offsets = [7, 0], sizes = [1, 32], strides = [1, 1]} : vector<16x32xf32> to vector<1x32xf32>
    %cst_84 = arith.constant 0.000000e+00 : f32
    %451 = vector.shape_cast %449 : vector<8x1xi1> to vector<8x1xi1>
    %452 = vector.broadcast %451 : vector<8x1xi1> to vector<8x32xi1>
    %453 = vector.shape_cast %450 : vector<1x32xf32> to vector<1x32xf32>
    %454 = vector.broadcast %453 : vector<1x32xf32> to vector<8x32xf32>
    %455 = vector.broadcast %cst_84 : f32 to vector<8x32xf32>
    %456 = arith.select %452, %454, %455 : vector<8x32xi1>, vector<8x32xf32>
    %457 = arith.maximumf %448, %456 : vector<8x32xf32>
    %458 = vector.extract_strided_slice %21 {offsets = [0, 8], sizes = [8, 1], strides = [1, 1]} : vector<8x16xi1> to vector<8x1xi1>
    %459 = vector.extract_strided_slice %384 {offsets = [8, 0], sizes = [1, 32], strides = [1, 1]} : vector<16x32xf32> to vector<1x32xf32>
    %cst_85 = arith.constant 0.000000e+00 : f32
    %460 = vector.shape_cast %458 : vector<8x1xi1> to vector<8x1xi1>
    %461 = vector.broadcast %460 : vector<8x1xi1> to vector<8x32xi1>
    %462 = vector.shape_cast %459 : vector<1x32xf32> to vector<1x32xf32>
    %463 = vector.broadcast %462 : vector<1x32xf32> to vector<8x32xf32>
    %464 = vector.broadcast %cst_85 : f32 to vector<8x32xf32>
    %465 = arith.select %461, %463, %464 : vector<8x32xi1>, vector<8x32xf32>
    %466 = arith.maximumf %457, %465 : vector<8x32xf32>
    %467 = vector.extract_strided_slice %21 {offsets = [0, 9], sizes = [8, 1], strides = [1, 1]} : vector<8x16xi1> to vector<8x1xi1>
    %468 = vector.extract_strided_slice %384 {offsets = [9, 0], sizes = [1, 32], strides = [1, 1]} : vector<16x32xf32> to vector<1x32xf32>
    %cst_86 = arith.constant 0.000000e+00 : f32
    %469 = vector.shape_cast %467 : vector<8x1xi1> to vector<8x1xi1>
    %470 = vector.broadcast %469 : vector<8x1xi1> to vector<8x32xi1>
    %471 = vector.shape_cast %468 : vector<1x32xf32> to vector<1x32xf32>
    %472 = vector.broadcast %471 : vector<1x32xf32> to vector<8x32xf32>
    %473 = vector.broadcast %cst_86 : f32 to vector<8x32xf32>
    %474 = arith.select %470, %472, %473 : vector<8x32xi1>, vector<8x32xf32>
    %475 = arith.maximumf %466, %474 : vector<8x32xf32>
    %476 = vector.extract_strided_slice %21 {offsets = [0, 10], sizes = [8, 1], strides = [1, 1]} : vector<8x16xi1> to vector<8x1xi1>
    %477 = vector.extract_strided_slice %384 {offsets = [10, 0], sizes = [1, 32], strides = [1, 1]} : vector<16x32xf32> to vector<1x32xf32>
    %cst_87 = arith.constant 0.000000e+00 : f32
    %478 = vector.shape_cast %476 : vector<8x1xi1> to vector<8x1xi1>
    %479 = vector.broadcast %478 : vector<8x1xi1> to vector<8x32xi1>
    %480 = vector.shape_cast %477 : vector<1x32xf32> to vector<1x32xf32>
    %481 = vector.broadcast %480 : vector<1x32xf32> to vector<8x32xf32>
    %482 = vector.broadcast %cst_87 : f32 to vector<8x32xf32>
    %483 = arith.select %479, %481, %482 : vector<8x32xi1>, vector<8x32xf32>
    %484 = arith.maximumf %475, %483 : vector<8x32xf32>
    %485 = vector.extract_strided_slice %21 {offsets = [0, 11], sizes = [8, 1], strides = [1, 1]} : vector<8x16xi1> to vector<8x1xi1>
    %486 = vector.extract_strided_slice %384 {offsets = [11, 0], sizes = [1, 32], strides = [1, 1]} : vector<16x32xf32> to vector<1x32xf32>
    %cst_88 = arith.constant 0.000000e+00 : f32
    %487 = vector.shape_cast %485 : vector<8x1xi1> to vector<8x1xi1>
    %488 = vector.broadcast %487 : vector<8x1xi1> to vector<8x32xi1>
    %489 = vector.shape_cast %486 : vector<1x32xf32> to vector<1x32xf32>
    %490 = vector.broadcast %489 : vector<1x32xf32> to vector<8x32xf32>
    %491 = vector.broadcast %cst_88 : f32 to vector<8x32xf32>
    %492 = arith.select %488, %490, %491 : vector<8x32xi1>, vector<8x32xf32>
    %493 = arith.maximumf %484, %492 : vector<8x32xf32>
    %494 = vector.extract_strided_slice %21 {offsets = [0, 12], sizes = [8, 1], strides = [1, 1]} : vector<8x16xi1> to vector<8x1xi1>
    %495 = vector.extract_strided_slice %384 {offsets = [12, 0], sizes = [1, 32], strides = [1, 1]} : vector<16x32xf32> to vector<1x32xf32>
    %cst_89 = arith.constant 0.000000e+00 : f32
    %496 = vector.shape_cast %494 : vector<8x1xi1> to vector<8x1xi1>
    %497 = vector.broadcast %496 : vector<8x1xi1> to vector<8x32xi1>
    %498 = vector.shape_cast %495 : vector<1x32xf32> to vector<1x32xf32>
    %499 = vector.broadcast %498 : vector<1x32xf32> to vector<8x32xf32>
    %500 = vector.broadcast %cst_89 : f32 to vector<8x32xf32>
    %501 = arith.select %497, %499, %500 : vector<8x32xi1>, vector<8x32xf32>
    %502 = arith.maximumf %493, %501 : vector<8x32xf32>
    %503 = vector.extract_strided_slice %21 {offsets = [0, 13], sizes = [8, 1], strides = [1, 1]} : vector<8x16xi1> to vector<8x1xi1>
    %504 = vector.extract_strided_slice %384 {offsets = [13, 0], sizes = [1, 32], strides = [1, 1]} : vector<16x32xf32> to vector<1x32xf32>
    %cst_90 = arith.constant 0.000000e+00 : f32
    %505 = vector.shape_cast %503 : vector<8x1xi1> to vector<8x1xi1>
    %506 = vector.broadcast %505 : vector<8x1xi1> to vector<8x32xi1>
    %507 = vector.shape_cast %504 : vector<1x32xf32> to vector<1x32xf32>
    %508 = vector.broadcast %507 : vector<1x32xf32> to vector<8x32xf32>
    %509 = vector.broadcast %cst_90 : f32 to vector<8x32xf32>
    %510 = arith.select %506, %508, %509 : vector<8x32xi1>, vector<8x32xf32>
    %511 = arith.maximumf %502, %510 : vector<8x32xf32>
    %512 = vector.extract_strided_slice %21 {offsets = [0, 14], sizes = [8, 1], strides = [1, 1]} : vector<8x16xi1> to vector<8x1xi1>
    %513 = vector.extract_strided_slice %384 {offsets = [14, 0], sizes = [1, 32], strides = [1, 1]} : vector<16x32xf32> to vector<1x32xf32>
    %cst_91 = arith.constant 0.000000e+00 : f32
    %514 = vector.shape_cast %512 : vector<8x1xi1> to vector<8x1xi1>
    %515 = vector.broadcast %514 : vector<8x1xi1> to vector<8x32xi1>
    %516 = vector.shape_cast %513 : vector<1x32xf32> to vector<1x32xf32>
    %517 = vector.broadcast %516 : vector<1x32xf32> to vector<8x32xf32>
    %518 = vector.broadcast %cst_91 : f32 to vector<8x32xf32>
    %519 = arith.select %515, %517, %518 : vector<8x32xi1>, vector<8x32xf32>
    %520 = arith.maximumf %511, %519 : vector<8x32xf32>
    %521 = vector.extract_strided_slice %21 {offsets = [0, 15], sizes = [8, 1], strides = [1, 1]} : vector<8x16xi1> to vector<8x1xi1>
    %522 = vector.extract_strided_slice %384 {offsets = [15, 0], sizes = [1, 32], strides = [1, 1]} : vector<16x32xf32> to vector<1x32xf32>
    %cst_92 = arith.constant 0.000000e+00 : f32
    %523 = vector.shape_cast %521 : vector<8x1xi1> to vector<8x1xi1>
    %524 = vector.broadcast %523 : vector<8x1xi1> to vector<8x32xi1>
    %525 = vector.shape_cast %522 : vector<1x32xf32> to vector<1x32xf32>
    %526 = vector.broadcast %525 : vector<1x32xf32> to vector<8x32xf32>
    %527 = vector.broadcast %cst_92 : f32 to vector<8x32xf32>
    %528 = arith.select %524, %526, %527 : vector<8x32xi1>, vector<8x32xf32>
    %529 = arith.maximumf %520, %528 : vector<8x32xf32>
    %cst_93 = arith.constant dense<0.000000e+00> : vector<8x16xf32>
    %530 = tpu.matmul %375, %9, %cst_93 {dimension_numbers = #tpu.dot_dimension_numbers<[1], [0], [0], [1], [0, 0, 1, 1], [], []>} : vector<8x3xf32>, vector<3x16xf32>, vector<8x16xf32> -> vector<8x16xf32>
    %cst_94 = arith.constant dense<0.000000e+00> : vector<8x16xf32>
    %531 = tpu.matmul %529, %10, %cst_94 {dimension_numbers = #tpu.dot_dimension_numbers<[1], [0], [0], [1], [0, 0, 1, 1], [], []>} : vector<8x32xf32>, vector<32x16xf32>, vector<8x16xf32> -> vector<8x16xf32>
    %532 = arith.addf %530, %531 : vector<8x16xf32>
    %533 = arith.addf %532, %30 : vector<8x16xf32>
    %cst_95 = arith.constant 0.000000e+00 : f32
    %534 = vector.broadcast %cst_95 : f32 to vector<8x16xf32>
    %535 = arith.maximumf %533, %534 : vector<8x16xf32>
    %cst_96 = arith.constant dense<0.000000e+00> : vector<8x1xf32>
    %536 = tpu.matmul %535, %12, %cst_96 {dimension_numbers = #tpu.dot_dimension_numbers<[1], [0], [0], [1], [0, 0, 1, 1], [], []>} : vector<8x16xf32>, vector<16x1xf32>, vector<8x1xf32> -> vector<8x1xf32>
    %537 = arith.addf %536, %32 : vector<8x1xf32>
    %538 = arith.negf %537 : vector<8x1xf32>
    %539 = math.exp %538 : vector<8x1xf32>
    %cst_97 = arith.constant 1.000000e+00 : f32
    %540 = vector.broadcast %cst_97 : f32 to vector<8x1xf32>
    %541 = arith.addf %540, %539 : vector<8x1xf32>
    %542 = arith.divf %540, %541 : vector<8x1xf32>
    %543 = vector.shape_cast %542 : vector<8x1xf32> to vector<8x1xf32>
    %544 = vector.broadcast %543 : vector<8x1xf32> to vector<8x3xf32>
    %545 = arith.select %35, %544, %375 : vector<8x3xi1>, vector<8x3xf32>
    %c0_98 = arith.constant 0 : index
    %c0_99 = arith.constant 0 : index
    %546 = vector.load %arg5[%c0_98, %c0_99] : memref<8x3xf32, #tpu.memory_space<vmem>>, vector<8x3xf32>
    tpu.vector_store %arg5[%c0_98, %c0_99], %545 {strides = array<i32>} : memref<8x3xf32, #tpu.memory_space<vmem>>, vector<8x3xf32>,
    return
  }
}

</mosaic_0001>

<llo_original>
// kernel: gcnet_forward.1
$region0: #{gcnet_forward.1}
  #allocation0 [shape = 'u32[]', space=smem, size = 0x4, offset = 0x4, fixed_abs, tag = 'smem constant byte address 0x4 - core index']
  #allocation1 [shape = 'u32[144,128]{1,0:T(1,128)}', space=vmem, size = 0x12000, scoped, tag = 'internal scratch']
  %s0 = inlined_call_operand.vmem [shape: f32[8,3], index: 0, kind: input, shape index: {}]
  %s1 = inlined_call_operand.vmem [shape: f32[16,1], index: 1, kind: input, shape index: {}]
  %s2 = inlined_call_operand.vmem [shape: s32[16,1], index: 2, kind: input, shape index: {}]
  %s3 = inlined_call_operand.vmem [shape: s32[1,16], index: 3, kind: input, shape index: {}]
  %s4 = inlined_call_operand.vmem [shape: f32[104,32], index: 4, kind: input, shape index: {}]
  %s5 = inlined_call_operand.vmem [shape: f32[8,3], index: 5, kind: output, shape index: {}]
  %s6 = sld [smem:[#allocation0]]
  $region30: #{gcnet_forward.1} parent=0
    _
  %s8 = ssub.s32 1, %s6
  %s9 = scalar_select 0, %s8, %s6
  // Predicated region
  $region2: #{gcnet_forward.1} parent=0 // pred_check
    _
  $region3: #{gcnet_forward.1} parent=0 // pred_check_branch
    %11 = sbr.rel (0) target = $region5
  $region4: #{gcnet_forward.1} parent=0 // pred_region
    _
  $region5: #{gcnet_forward.1} parent=0 // pred_fallthru
    _
  // Predicated region
  $region6: #{gcnet_forward.1} parent=0 // pred_check
    _
  $region7: #{gcnet_forward.1} parent=0 // pred_check_branch
    %13 = sbr.rel (0) target = $region9
  $region8: #{gcnet_forward.1} parent=0 // pred_region
    _
  $region9: #{gcnet_forward.1} parent=0 // pred_fallthru
    _
  // Predicated region
  $region10: #{gcnet_forward.1} parent=0 // pred_check
    _
  $region11: #{gcnet_forward.1} parent=0 // pred_check_branch
    %15 = sbr.rel (0) target = $region13
  $region12: #{gcnet_forward.1} parent=0 // pred_region
    _
  $region13: #{gcnet_forward.1} parent=0 // pred_fallthru
    _
  // Predicated region
  $region14: #{gcnet_forward.1} parent=0 // pred_check
    _
  $region15: #{gcnet_forward.1} parent=0 // pred_check_branch
    %17 = sbr.rel (0) target = $region17
  $region16: #{gcnet_forward.1} parent=0 // pred_region
    _
  $region17: #{gcnet_forward.1} parent=0 // pred_fallthru
    _
  // Predicated region
  $region18: #{gcnet_forward.1} parent=0 // pred_check
    _
  $region19: #{gcnet_forward.1} parent=0 // pred_check_branch
    %19 = sbr.rel (0) target = $region21
  $region20: #{gcnet_forward.1} parent=0 // pred_region
    _
  $region21: #{gcnet_forward.1} parent=0 // pred_fallthru
    _
  %v20 = vld [vmem:[%s0] sm:$0xff]
  %v21 = vld [vmem:[%s1] sm:$0xff]
  %v22 = vld [vmem:[%s1 + $0x8] sm:$0xff]
  %v23 = vld [vmem:[%s2] sm:$0xff]
  %v24 = vld [vmem:[%s2 + $0x8] sm:$0xff]
  %v25 = vld [vmem:[%s3] sm:$0x1]
  %v26 = vld [vmem:[%s4] sm:$0x7]
  %v27 = vld [vmem:[%s4 + $0x3] sm:$0x1]
  %v28 = vld [vmem:[%s4 + $0x4] sm:$0x1]
  %v29 = vld [vmem:[%s4 + $0x8] sm:$0xff]
  %v30 = vld [vmem:[%s4 + $0x10] sm:$0xff]
  %v31 = vld [vmem:[%s4 + $0x18] sm:$0x1]
  %v32 = vld [vmem:[%s4 + $0x20] sm:$0x7]
  %v33 = vld [vmem:[%s4 + $0x28] sm:$0xff]
  %v34 = vld [vmem:[%s4 + $0x30] sm:$0xff]
  %v35 = vld [vmem:[%s4 + $0x38] sm:$0xff]
  %v36 = vld [vmem:[%s4 + $0x40] sm:$0xff]
  %v37 = vld [vmem:[%s4 + $0x48] sm:$0x1]
  %v38 = vld [vmem:[%s4 + $0x50] sm:$0xff]
  %v39 = vld [vmem:[%s4 + $0x58] sm:$0xff]
  %v40 = vld [vmem:[%s4 + $0x60] sm:$0x1]
  %v41 = vlaneseq
  %v42 = vand.u32 %v41, 127
  %43 = vset.pattern.permute.xlu0 0
  %44 = vperm.xlu0 %43, %v23
  %v45 = vpop.permute.xlu0 %44
  %46 = vset.pattern.permute.xlu0 0
  %47 = vperm.xlu0 %46, %v24
  %v48 = vpop.permute.xlu0 %47
  %vm49 = vcmp.eq.s32.totalorder %v45, %v42
  %vm50 = vcmp.eq.s32.totalorder %v48, %v42
  %v51 = vsel %vm49, 1, 0
  %v52 = vsel %vm50, 1, 0
  %v53 = vcvt.s32.f32 %v51
  %v54 = vcvt.s32.f32 %v52
  %v55 = vlaneseq
  %v56 = vshrl.u32 %v55, 7
  %v57 = vlaneseq
  %v58 = vshrl.u32 %v57, 7
  %v59 = vsub.s32 0, %v58
  %v60 = vrot.slane %v25, %v59
  %vm61 = vcmp.eq.s32.totalorder %v56, %v60
  %63 = vset.pattern.permute.xlu0 0
  %64 = vperm.xlu0 %63, %v21
  %v65 = vpop.permute.xlu0 %64
  %68 = vset.pattern.permute.xlu0 0
  %69 = vperm.xlu0 %68, %v22
  %v70 = vpop.permute.xlu0 %69
  %v72 = vlaneseq
  %v73 = vshrl.u32 %v72, 7
  %v74 = vsub.s32 0, %v73
  %v75 = vrot.slane %v27, %v74
  %v76 = vmul.f32 %v65, %v75
  %v77 = vmul.f32 %v70, %v75
  %v78 = vlaneseq
  %v79 = vshrl.u32 %v78, 7
  %v80 = vsub.s32 0, %v79
  %v81 = vrot.slane %v28, %v80
  %v82 = vadd.f32 %v76, %v81
  %v83 = vadd.f32 %v77, %v81
  %v84 = vlaneseq
  %v85 = vshrl.u32 %v84, 7
  %v86 = vsub.s32 0, %v85
  %v87 = vrot.slane %v31, %v86
  %v88 = vlaneseq
  %v89 = vshrl.u32 %v88, 7
  %v90 = vsub.s32 0, %v89
  %v91 = vrot.slane %v37, %v90
  %v92 = vlaneseq
  %v93 = vshrl.u32 %v92, 7
  %v94 = vsub.s32 0, %v93
  %v95 = vrot.slane %v40, %v94
  %vm96 = vcmp.eq.s32.totalorder %v42, 2
  %vm97 = vcmask 64512
  %v99 = vsel %vm97, %v53, 0
  %v102 = vsel %vm97, %v54, 0
  %104 = vmatprep.subr.mxu0 0.0
  %105 = vmatpush1.msra.mxu0 %v20
  %106 = vmatprep.subr.mxu0 0.0
  %107 = vmatpush1.msra.mxu0 0.0
  %108 = vmatprep.subr.mxu0 0.0
  %109 = vmatpush1.msra.mxu0 0.0
  %110 = vmatprep.subr.mxu0 0.0
  %111 = vmatpush1.msra.mxu0 0.0
  %112 = vmatprep.subr.mxu0 0.0
  %113 = vmatpush1.msra.mxu0 0.0
  %114 = vmatprep.subr.mxu0 0.0
  %115 = vmatpush1.msra.mxu0 0.0
  %116 = vmatprep.subr.mxu0 0.0
  %117 = vmatpush1.msra.mxu0 0.0
  %118 = vmatprep.subr.mxu0 0.0
  %119 = vmatpush1.msra.mxu0 0.0
  %120 = vmatprep.subr.mxu0 0.0
  %121 = vmatpush1.msra.mxu0 0.0
  %122 = vmatprep.subr.mxu0 0.0
  %123 = vmatpush1.msra.mxu0 0.0
  %124 = vmatprep.subr.mxu0 0.0
  %125 = vmatpush1.msra.mxu0 0.0
  %126 = vmatprep.subr.mxu0 0.0
  %127 = vmatpush1.msra.mxu0 0.0
  %128 = vmatprep.subr.mxu0 0.0
  %129 = vmatpush1.msra.mxu0 0.0
  %130 = vmatprep.subr.mxu0 0.0
  %131 = vmatpush1.msra.mxu0 0.0
  %132 = vmatprep.subr.mxu0 0.0
  %133 = vmatpush1.msra.mxu0 0.0
  %134 = vmatprep.subr.mxu0 0.0
  %135 = vmatpush1.msra.mxu0 0.0
  %136 = vmatprep.subr.mxu0 0.0
  %137 = vmatpush1.msra.mxu0 0.0
  %138 = vmatprep.subr.mxu0 0.0
  %139 = vmatpush1.msra.mxu0 0.0
  %140 = vmatprep.subr.mxu0 0.0
  %141 = vmatpush1.msra.mxu0 0.0
  %142 = vmatprep.subr.mxu0 0.0
  %143 = vmatpush1.msra.mxu0 0.0
  %144 = vmatprep.subr.mxu0 0.0
  %145 = vmatpush1.msra.mxu0 0.0
  %146 = vmatprep.subr.mxu0 0.0
  %147 = vmatpush1.msra.mxu0 0.0
  %148 = vmatprep.subr.mxu0 0.0
  %149 = vmatpush1.msra.mxu0 0.0
  %150 = vmatprep.subr.mxu0 0.0
  %151 = vmatpush1.msra.mxu0 0.0
  %152 = vmatprep.subr.mxu0 0.0
  %153 = vmatpush1.msra.mxu0 0.0
  %154 = vmatprep.subr.mxu0 0.0
  %155 = vmatpush1.msra.mxu0 0.0
  %156 = vmatprep.subr.mxu0 0.0
  %157 = vmatpush1.msra.mxu0 0.0
  %158 = vmatprep.subr.mxu0 0.0
  %159 = vmatpush1.msra.mxu0 0.0
  %160 = vmatprep.subr.mxu0 0.0
  %161 = vmatpush1.msra.mxu0 0.0
  %162 = vmatprep.subr.mxu0 0.0
  %163 = vmatpush1.msra.mxu0 0.0
  %164 = vmatprep.subr.mxu0 0.0
  %165 = vmatpush1.msra.mxu0 0.0
  %166 = vmatprep.subr.mxu0 0.0
  %167 = vmatpush1.msra.mxu0 0.0
  %168 = vmatprep.mubr.f32.mxu0 0.0
  %169 = vmatmul.mubr.f32.gmra.mrb[0].mxu0 %v99
  %v170 = vpop.f32.mrb[0].mxu0
  %v171 = vadd.f32 0.0, %v170
  %v172 = vpop.f32.mrb[0].mxu0
  %173 = vmatprep.mubr.f32.mxu0 0.0
  %174 = vmatmul.mubr.f32.gmra.mrb[0].mxu0 %v102
  %v175 = vpop.f32.mrb[0].mxu0
  %v176 = vadd.f32 0.0, %v175
  %v177 = vpop.f32.mrb[0].mxu0
  %178 = vdwg.mxu0
  %vm179 = vcmask 23552
  %v181 = vsel %vm179, %v171, 0
  %v184 = vsel %vm179, %v176, 0
  %vm186 = vcmask 1042432
  %v188 = vsel %vm186, %v26, 0
  %190 = vmatprep.subr.mxu0 0.0
  %191 = vmatpush1.msra.mxu0 %v188
  %192 = vmatprep.subr.mxu0 0.0
  %193 = vmatpush1.msra.mxu0 0.0
  %194 = vmatprep.subr.mxu0 0.0
  %195 = vmatpush1.msra.mxu0 0.0
  %196 = vmatprep.subr.mxu0 0.0
  %197 = vmatpush1.msra.mxu0 0.0
  %198 = vmatprep.subr.mxu0 0.0
  %199 = vmatpush1.msra.mxu0 0.0
  %200 = vmatprep.subr.mxu0 0.0
  %201 = vmatpush1.msra.mxu0 0.0
  %202 = vmatprep.subr.mxu0 0.0
  %203 = vmatpush1.msra.mxu0 0.0
  %204 = vmatprep.subr.mxu0 0.0
  %205 = vmatpush1.msra.mxu0 0.0
  %206 = vmatprep.subr.mxu0 0.0
  %207 = vmatpush1.msra.mxu0 0.0
  %208 = vmatprep.subr.mxu0 0.0
  %209 = vmatpush1.msra.mxu0 0.0
  %210 = vmatprep.subr.mxu0 0.0
  %211 = vmatpush1.msra.mxu0 0.0
  %212 = vmatprep.subr.mxu0 0.0
  %213 = vmatpush1.msra.mxu0 0.0
  %214 = vmatprep.subr.mxu0 0.0
  %215 = vmatpush1.msra.mxu0 0.0
  %216 = vmatprep.subr.mxu0 0.0
  %217 = vmatpush1.msra.mxu0 0.0
  %218 = vmatprep.subr.mxu0 0.0
  %219 = vmatpush1.msra.mxu0 0.0
  %220 = vmatprep.subr.mxu0 0.0
  %221 = vmatpush1.msra.mxu0 0.0
  %222 = vmatprep.subr.mxu0 0.0
  %223 = vmatpush1.msra.mxu0 0.0
  %224 = vmatprep.subr.mxu0 0.0
  %225 = vmatpush1.msra.mxu0 0.0
  %226 = vmatprep.subr.mxu0 0.0
  %227 = vmatpush1.msra.mxu0 0.0
  %228 = vmatprep.subr.mxu0 0.0
  %229 = vmatpush1.msra.mxu0 0.0
  %230 = vmatprep.subr.mxu0 0.0
  %231 = vmatpush1.msra.mxu0 0.0
  %232 = vmatprep.subr.mxu0 0.0
  %233 = vmatpush1.msra.mxu0 0.0
  %234 = vmatprep.subr.mxu0 0.0
  %235 = vmatpush1.msra.mxu0 0.0
  %236 = vmatprep.subr.mxu0 0.0
  %237 = vmatpush1.msra.mxu0 0.0
  %238 = vmatprep.subr.mxu0 0.0
  %239 = vmatpush1.msra.mxu0 0.0
  %240 = vmatprep.subr.mxu0 0.0
  %241 = vmatpush1.msra.mxu0 0.0
  %242 = vmatprep.subr.mxu0 0.0
  %243 = vmatpush1.msra.mxu0 0.0
  %244 = vmatprep.subr.mxu0 0.0
  %245 = vmatpush1.msra.mxu0 0.0
  %246 = vmatprep.subr.mxu0 0.0
  %247 = vmatpush1.msra.mxu0 0.0
  %248 = vmatprep.subr.mxu0 0.0
  %249 = vmatpush1.msra.mxu0 0.0
  %250 = vmatprep.subr.mxu0 0.0
  %251 = vmatpush1.msra.mxu0 0.0
  %252 = vmatprep.subr.mxu0 0.0
  %253 = vmatpush1.msra.mxu0 0.0
  %254 = vmatprep.mubr.f32.mxu0 0.0
  %255 = vmatmul.mubr.f32.gmra.mrb[0].mxu0 %v181
  %v256 = vpop.f32.mrb[0].mxu0
  %v257 = vadd.f32 %v82, %v256
  %v258 = vpop.f32.mrb[0].mxu0
  %259 = vmatprep.mubr.f32.mxu0 0.0
  %260 = vmatmul.mubr.f32.gmra.mrb[0].mxu0 %v184
  %v261 = vpop.f32.mrb[0].mxu0
  %v262 = vadd.f32 %v83, %v261
  %v263 = vpop.f32.mrb[0].mxu0
  %264 = vdwg.mxu0
  %v265 = vmax.f32 %v257, 0.0
  %v266 = vmax.f32 %v262, 0.0
  %vm267 = vcmask 130048
  %v269 = vsel %vm267, %v265, 0
  %v272 = vsel %vm267, %v266, 0
  %274 = vmatprep.subr.mxu0 0.0
  %275 = vmatpush1.msra.mxu0 %v29
  %276 = vmatprep.subr.mxu0 0.0
  %277 = vmatpush1.msra.mxu0 %v30
  %278 = vmatprep.subr.mxu0 0.0
  %279 = vmatpush1.msra.mxu0 0.0
  %280 = vmatprep.subr.mxu0 0.0
  %281 = vmatpush1.msra.mxu0 0.0
  %282 = vmatprep.subr.mxu0 0.0
  %283 = vmatpush1.msra.mxu0 0.0
  %284 = vmatprep.subr.mxu0 0.0
  %285 = vmatpush1.msra.mxu0 0.0
  %286 = vmatprep.subr.mxu0 0.0
  %287 = vmatpush1.msra.mxu0 0.0
  %288 = vmatprep.subr.mxu0 0.0
  %289 = vmatpush1.msra.mxu0 0.0
  %290 = vmatprep.subr.mxu0 0.0
  %291 = vmatpush1.msra.mxu0 0.0
  %292 = vmatprep.subr.mxu0 0.0
  %293 = vmatpush1.msra.mxu0 0.0
  %294 = vmatprep.subr.mxu0 0.0
  %295 = vmatpush1.msra.mxu0 0.0
  %296 = vmatprep.subr.mxu0 0.0
  %297 = vmatpush1.msra.mxu0 0.0
  %298 = vmatprep.subr.mxu0 0.0
  %299 = vmatpush1.msra.mxu0 0.0
  %300 = vmatprep.subr.mxu0 0.0
  %301 = vmatpush1.msra.mxu0 0.0
  %302 = vmatprep.subr.mxu0 0.0
  %303 = vmatpush1.msra.mxu0 0.0
  %304 = vmatprep.subr.mxu0 0.0
  %305 = vmatpush1.msra.mxu0 0.0
  %306 = vmatprep.subr.mxu0 0.0
  %307 = vmatpush1.msra.mxu0 0.0
  %308 = vmatprep.subr.mxu0 0.0
  %309 = vmatpush1.msra.mxu0 0.0
  %310 = vmatprep.subr.mxu0 0.0
  %311 = vmatpush1.msra.mxu0 0.0
  %312 = vmatprep.subr.mxu0 0.0
  %313 = vmatpush1.msra.mxu0 0.0
  %314 = vmatprep.subr.mxu0 0.0
  %315 = vmatpush1.msra.mxu0 0.0
  %316 = vmatprep.subr.mxu0 0.0
  %317 = vmatpush1.msra.mxu0 0.0
  %318 = vmatprep.subr.mxu0 0.0
  %319 = vmatpush1.msra.mxu0 0.0
  %320 = vmatprep.subr.mxu0 0.0
  %321 = vmatpush1.msra.mxu0 0.0
  %322 = vmatprep.subr.mxu0 0.0
  %323 = vmatpush1.msra.mxu0 0.0
  %324 = vmatprep.subr.mxu0 0.0
  %325 = vmatpush1.msra.mxu0 0.0
  %326 = vmatprep.subr.mxu0 0.0
  %327 = vmatpush1.msra.mxu0 0.0
  %328 = vmatprep.subr.mxu0 0.0
  %329 = vmatpush1.msra.mxu0 0.0
  %330 = vmatprep.subr.mxu0 0.0
  %331 = vmatpush1.msra.mxu0 0.0
  %332 = vmatprep.subr.mxu0 0.0
  %333 = vmatpush1.msra.mxu0 0.0
  %334 = vmatprep.subr.mxu0 0.0
  %335 = vmatpush1.msra.mxu0 0.0
  %336 = vmatprep.subr.mxu0 0.0
  %337 = vmatpush1.msra.mxu0 0.0
  %338 = vmatprep.mubr.f32.mxu0 0.0
  %339 = vmatmul.mubr.f32.gmra.mrb[0].mxu0 %v269
  %v340 = vpop.f32.mrb[0].mxu0
  %v341 = vadd.f32 %v87, %v340
  %v342 = vpop.f32.mrb[0].mxu0
  %343 = vmatprep.mubr.f32.mxu0 0.0
  %344 = vmatmul.mubr.f32.gmra.mrb[0].mxu0 %v272
  %v345 = vpop.f32.mrb[0].mxu0
  %v346 = vadd.f32 %v87, %v345
  %v347 = vpop.f32.mrb[0].mxu0
  %348 = vdwg.mxu0
  %v349 = vmax.f32 %v341, 0.0
  %v350 = vmax.f32 %v346, 0.0
  %v351 = vsel %vm61, 1, 0
  %352 = vset.pattern.permute.xlu0 0
  %353 = vperm.xlu0 %352, %v351
  %v354 = vpop.permute.xlu0 %353
  %vm355 = vcmp.eq.s32.totalorder %v354, 1
  %v356 = vlaneseq
  %v357 = vshrl.u32 %v356, 7
  %v358 = vsub.s32 0, %v357
  %v359 = vrot.slane %v349, %v358
  %v360 = vsel %vm355, %v359, 0.0
  %v361 = vmax.f32 %v360, 0.0
  %362 = vset.pattern.permute.xlu0 1
  %363 = vperm.xlu0 %362, %v351
  %v364 = vpop.permute.xlu0 %363
  %vm365 = vcmp.eq.s32.totalorder %v364, 1
  %v366 = vlaneseq
  %v367 = vshrl.u32 %v366, 7
  %v368 = vsub.s32 1, %v367
  %v369 = vrot.slane %v349, %v368
  %v370 = vsel %vm365, %v369, 0.0
  %v371 = vmax.f32 %v361, %v370
  %372 = vset.pattern.permute.xlu0 2
  %373 = vperm.xlu0 %372, %v351
  %v374 = vpop.permute.xlu0 %373
  %vm375 = vcmp.eq.s32.totalorder %v374, 1
  %v376 = vlaneseq
  %v377 = vshrl.u32 %v376, 7
  %v378 = vsub.s32 2, %v377
  %v379 = vrot.slane %v349, %v378
  %v380 = vsel %vm375, %v379, 0.0
  %v381 = vmax.f32 %v371, %v380
  %382 = vset.pattern.permute.xlu0 3
  %383 = vperm.xlu0 %382, %v351
  %v384 = vpop.permute.xlu0 %383
  %vm385 = vcmp.eq.s32.totalorder %v384, 1
  %v386 = vlaneseq
  %v387 = vshrl.u32 %v386, 7
  %v388 = vsub.s32 3, %v387
  %v389 = vrot.slane %v349, %v388
  %v390 = vsel %vm385, %v389, 0.0
  %v391 = vmax.f32 %v381, %v390
  %392 = vset.pattern.permute.xlu0 4
  %393 = vperm.xlu0 %392, %v351
  %v394 = vpop.permute.xlu0 %393
  %vm395 = vcmp.eq.s32.totalorder %v394, 1
  %v396 = vlaneseq
  %v397 = vshrl.u32 %v396, 7
  %v398 = vsub.s32 4, %v397
  %v399 = vrot.slane %v349, %v398
  %v400 = vsel %vm395, %v399, 0.0
  %v401 = vmax.f32 %v391, %v400
  %402 = vset.pattern.permute.xlu0 5
  %403 = vperm.xlu0 %402, %v351
  %v404 = vpop.permute.xlu0 %403
  %vm405 = vcmp.eq.s32.totalorder %v404, 1
  %v406 = vlaneseq
  %v407 = vshrl.u32 %v406, 7
  %v408 = vsub.s32 5, %v407
  %v409 = vrot.slane %v349, %v408
  %v410 = vsel %vm405, %v409, 0.0
  %v411 = vmax.f32 %v401, %v410
  %412 = vset.pattern.permute.xlu0 6
  %413 = vperm.xlu0 %412, %v351
  %v414 = vpop.permute.xlu0 %413
  %vm415 = vcmp.eq.s32.totalorder %v414, 1
  %v416 = vlaneseq
  %v417 = vshrl.u32 %v416, 7
  %v418 = vsub.s32 6, %v417
  %v419 = vrot.slane %v349, %v418
  %v420 = vsel %vm415, %v419, 0.0
  %v421 = vmax.f32 %v411, %v420
  %422 = vset.pattern.permute.xlu0 7
  %423 = vperm.xlu0 %422, %v351
  %v424 = vpop.permute.xlu0 %423
  %vm425 = vcmp.eq.s32.totalorder %v424, 1
  %v426 = vlaneseq
  %v427 = vshrl.u32 %v426, 7
  %v428 = vsub.s32 7, %v427
  %v429 = vrot.slane %v349, %v428
  %v430 = vsel %vm425, %v429, 0.0
  %v431 = vmax.f32 %v421, %v430
  %432 = vset.pattern.permute.xlu0 8
  %433 = vperm.xlu0 %432, %v351
  %v434 = vpop.permute.xlu0 %433
  %vm435 = vcmp.eq.s32.totalorder %v434, 1
  %v436 = vlaneseq
  %v437 = vshrl.u32 %v436, 7
  %v438 = vsub.s32 0, %v437
  %v439 = vrot.slane %v350, %v438
  %v440 = vsel %vm435, %v439, 0.0
  %v441 = vmax.f32 %v431, %v440
  %442 = vset.pattern.permute.xlu0 9
  %443 = vperm.xlu0 %442, %v351
  %v444 = vpop.permute.xlu0 %443
  %vm445 = vcmp.eq.s32.totalorder %v444, 1
  %v446 = vlaneseq
  %v447 = vshrl.u32 %v446, 7
  %v448 = vsub.s32 1, %v447
  %v449 = vrot.slane %v350, %v448
  %v450 = vsel %vm445, %v449, 0.0
  %v451 = vmax.f32 %v441, %v450
  %452 = vset.pattern.permute.xlu0 10
  %453 = vperm.xlu0 %452, %v351
  %v454 = vpop.permute.xlu0 %453
  %vm455 = vcmp.eq.s32.totalorder %v454, 1
  %v456 = vlaneseq
  %v457 = vshrl.u32 %v456, 7
  %v458 = vsub.s32 2, %v457
  %v459 = vrot.slane %v350, %v458
  %v460 = vsel %vm455, %v459, 0.0
  %v461 = vmax.f32 %v451, %v460
  %462 = vset.pattern.permute.xlu0 11
  %463 = vperm.xlu0 %462, %v351
  %v464 = vpop.permute.xlu0 %463
  %vm465 = vcmp.eq.s32.totalorder %v464, 1
  %v466 = vlaneseq
  %v467 = vshrl.u32 %v466, 7
  %v468 = vsub.s32 3, %v467
  %v469 = vrot.slane %v350, %v468
  %v470 = vsel %vm465, %v469, 0.0
  %v471 = vmax.f32 %v461, %v470
  %472 = vset.pattern.permute.xlu0 12
  %473 = vperm.xlu0 %472, %v351
  %v474 = vpop.permute.xlu0 %473
  %vm475 = vcmp.eq.s32.totalorder %v474, 1
  %v476 = vlaneseq
  %v477 = vshrl.u32 %v476, 7
  %v478 = vsub.s32 4, %v477
  %v479 = vrot.slane %v350, %v478
  %v480 = vsel %vm475, %v479, 0.0
  %v481 = vmax.f32 %v471, %v480
  %482 = vset.pattern.permute.xlu0 13
  %483 = vperm.xlu0 %482, %v351
  %v484 = vpop.permute.xlu0 %483
  %vm485 = vcmp.eq.s32.totalorder %v484, 1
  %v486 = vlaneseq
  %v487 = vshrl.u32 %v486, 7
  %v488 = vsub.s32 5, %v487
  %v489 = vrot.slane %v350, %v488
  %v490 = vsel %vm485, %v489, 0.0
  %v491 = vmax.f32 %v481, %v490
  %492 = vset.pattern.permute.xlu0 14
  %493 = vperm.xlu0 %492, %v351
  %v494 = vpop.permute.xlu0 %493
  %vm495 = vcmp.eq.s32.totalorder %v494, 1
  %v496 = vlaneseq
  %v497 = vshrl.u32 %v496, 7
  %v498 = vsub.s32 6, %v497
  %v499 = vrot.slane %v350, %v498
  %v500 = vsel %vm495, %v499, 0.0
  %v501 = vmax.f32 %v491, %v500
  %502 = vset.pattern.permute.xlu0 15
  %503 = vperm.xlu0 %502, %v351
  %v504 = vpop.permute.xlu0 %503
  %vm505 = vcmp.eq.s32.totalorder %v504, 1
  %v506 = vlaneseq
  %v507 = vshrl.u32 %v506, 7
  %v508 = vsub.s32 7, %v507
  %v509 = vrot.slane %v350, %v508
  %v510 = vsel %vm505, %v509, 0.0
  %v511 = vmax.f32 %v501, %v510
  %vm512 = vcmask 261120
  %v514 = vsel %vm512, %v511, 0
  %516 = vmatprep.subr.mxu0 0.0
  %517 = vmatpush1.msra.mxu0 %v33
  %518 = vmatprep.subr.mxu0 0.0
  %519 = vmatpush1.msra.mxu0 %v34
  %520 = vmatprep.subr.mxu0 0.0
  %521 = vmatpush1.msra.mxu0 %v35
  %522 = vmatprep.subr.mxu0 0.0
  %523 = vmatpush1.msra.mxu0 %v36
  %524 = vmatprep.subr.mxu0 0.0
  %525 = vmatpush1.msra.mxu0 0.0
  %526 = vmatprep.subr.mxu0 0.0
  %527 = vmatpush1.msra.mxu0 0.0
  %528 = vmatprep.subr.mxu0 0.0
  %529 = vmatpush1.msra.mxu0 0.0
  %530 = vmatprep.subr.mxu0 0.0
  %531 = vmatpush1.msra.mxu0 0.0
  %532 = vmatprep.subr.mxu0 0.0
  %533 = vmatpush1.msra.mxu0 0.0
  %534 = vmatprep.subr.mxu0 0.0
  %535 = vmatpush1.msra.mxu0 0.0
  %536 = vmatprep.subr.mxu0 0.0
  %537 = vmatpush1.msra.mxu0 0.0
  %538 = vmatprep.subr.mxu0 0.0
  %539 = vmatpush1.msra.mxu0 0.0
  %540 = vmatprep.subr.mxu0 0.0
  %541 = vmatpush1.msra.mxu0 0.0
  %542 = vmatprep.subr.mxu0 0.0
  %543 = vmatpush1.msra.mxu0 0.0
  %544 = vmatprep.subr.mxu0 0.0
  %545 = vmatpush1.msra.mxu0 0.0
  %546 = vmatprep.subr.mxu0 0.0
  %547 = vmatpush1.msra.mxu0 0.0
  %548 = vmatprep.subr.mxu0 0.0
  %549 = vmatpush1.msra.mxu0 0.0
  %550 = vmatprep.subr.mxu0 0.0
  %551 = vmatpush1.msra.mxu0 0.0
  %552 = vmatprep.subr.mxu0 0.0
  %553 = vmatpush1.msra.mxu0 0.0
  %554 = vmatprep.subr.mxu0 0.0
  %555 = vmatpush1.msra.mxu0 0.0
  %556 = vmatprep.subr.mxu0 0.0
  %557 = vmatpush1.msra.mxu0 0.0
  %558 = vmatprep.subr.mxu0 0.0
  %559 = vmatpush1.msra.mxu0 0.0
  %560 = vmatprep.subr.mxu0 0.0
  %561 = vmatpush1.msra.mxu0 0.0
  %562 = vmatprep.subr.mxu0 0.0
  %563 = vmatpush1.msra.mxu0 0.0
  %564 = vmatprep.subr.mxu0 0.0
  %565 = vmatpush1.msra.mxu0 0.0
  %566 = vmatprep.subr.mxu0 0.0
  %567 = vmatpush1.msra.mxu0 0.0
  %568 = vmatprep.subr.mxu0 0.0
  %569 = vmatpush1.msra.mxu0 0.0
  %570 = vmatprep.subr.mxu0 0.0
  %571 = vmatpush1.msra.mxu0 0.0
  %572 = vmatprep.subr.mxu0 0.0
  %573 = vmatpush1.msra.mxu0 0.0
  %574 = vmatprep.subr.mxu0 0.0
  %575 = vmatpush1.msra.mxu0 0.0
  %576 = vmatprep.subr.mxu0 0.0
  %577 = vmatpush1.msra.mxu0 0.0
  %578 = vmatprep.subr.mxu0 0.0
  %579 = vmatpush1.msra.mxu0 0.0
  %580 = vmatprep.mubr.f32.mxu0 0.0
  %581 = vmatmul.mubr.f32.gmra.mrb[0].mxu0 %v514
  %v582 = vpop.f32.mrb[0].mxu0
  %v583 = vadd.f32 0.0, %v582
  %v584 = vpop.f32.mrb[0].mxu0
  %585 = vdwg.mxu0
  %v587 = vsel %vm179, %v20, 0
  %v590 = vsel %vm186, %v32, 0
  %592 = vmatprep.subr.mxu0 0.0
  %593 = vmatpush1.msra.mxu0 %v590
  %594 = vmatprep.subr.mxu0 0.0
  %595 = vmatpush1.msra.mxu0 0.0
  %596 = vmatprep.subr.mxu0 0.0
  %597 = vmatpush1.msra.mxu0 0.0
  %598 = vmatprep.subr.mxu0 0.0
  %599 = vmatpush1.msra.mxu0 0.0
  %600 = vmatprep.subr.mxu0 0.0
  %601 = vmatpush1.msra.mxu0 0.0
  %602 = vmatprep.subr.mxu0 0.0
  %603 = vmatpush1.msra.mxu0 0.0
  %604 = vmatprep.subr.mxu0 0.0
  %605 = vmatpush1.msra.mxu0 0.0
  %606 = vmatprep.subr.mxu0 0.0
  %607 = vmatpush1.msra.mxu0 0.0
  %608 = vmatprep.subr.mxu0 0.0
  %609 = vmatpush1.msra.mxu0 0.0
  %610 = vmatprep.subr.mxu0 0.0
  %611 = vmatpush1.msra.mxu0 0.0
  %612 = vmatprep.subr.mxu0 0.0
  %613 = vmatpush1.msra.mxu0 0.0
  %614 = vmatprep.subr.mxu0 0.0
  %615 = vmatpush1.msra.mxu0 0.0
  %616 = vmatprep.subr.mxu0 0.0
  %617 = vmatpush1.msra.mxu0 0.0
  %618 = vmatprep.subr.mxu0 0.0
  %619 = vmatpush1.msra.mxu0 0.0
  %620 = vmatprep.subr.mxu0 0.0
  %621 = vmatpush1.msra.mxu0 0.0
  %622 = vmatprep.subr.mxu0 0.0
  %623 = vmatpush1.msra.mxu0 0.0
  %624 = vmatprep.subr.mxu0 0.0
  %625 = vmatpush1.msra.mxu0 0.0
  %626 = vmatprep.subr.mxu0 0.0
  %627 = vmatpush1.msra.mxu0 0.0
  %628 = vmatprep.subr.mxu0 0.0
  %629 = vmatpush1.msra.mxu0 0.0
  %630 = vmatprep.subr.mxu0 0.0
  %631 = vmatpush1.msra.mxu0 0.0
  %632 = vmatprep.subr.mxu0 0.0
  %633 = vmatpush1.msra.mxu0 0.0
  %634 = vmatprep.subr.mxu0 0.0
  %635 = vmatpush1.msra.mxu0 0.0
  %636 = vmatprep.subr.mxu0 0.0
  %637 = vmatpush1.msra.mxu0 0.0
  %638 = vmatprep.subr.mxu0 0.0
  %639 = vmatpush1.msra.mxu0 0.0
  %640 = vmatprep.subr.mxu0 0.0
  %641 = vmatpush1.msra.mxu0 0.0
  %642 = vmatprep.subr.mxu0 0.0
  %643 = vmatpush1.msra.mxu0 0.0
  %644 = vmatprep.subr.mxu0 0.0
  %645 = vmatpush1.msra.mxu0 0.0
  %646 = vmatprep.subr.mxu0 0.0
  %647 = vmatpush1.msra.mxu0 0.0
  %648 = vmatprep.subr.mxu0 0.0
  %649 = vmatpush1.msra.mxu0 0.0
  %650 = vmatprep.subr.mxu0 0.0
  %651 = vmatpush1.msra.mxu0 0.0
  %652 = vmatprep.subr.mxu0 0.0
  %653 = vmatpush1.msra.mxu0 0.0
  %654 = vmatprep.subr.mxu0 0.0
  %655 = vmatpush1.msra.mxu0 0.0
  %656 = vmatprep.mubr.f32.mxu0 0.0
  %657 = vmatmul.mubr.f32.gmra.mrb[0].mxu0 %v587
  %v658 = vpop.f32.mrb[0].mxu0
  %v659 = vadd.f32 %v583, %v658
  %v660 = vpop.f32.mrb[0].mxu0
  %661 = vdwg.mxu0
  %v662 = vadd.f32 %v659, %v91
  %v663 = vmax.f32 %v662, 0.0
  %v665 = vsel %vm267, %v663, 0
  %667 = vmatprep.subr.mxu0 0.0
  %668 = vmatpush1.msra.mxu0 %v38
  %669 = vmatprep.subr.mxu0 0.0
  %670 = vmatpush1.msra.mxu0 %v39
  %671 = vmatprep.subr.mxu0 0.0
  %672 = vmatpush1.msra.mxu0 0.0
  %673 = vmatprep.subr.mxu0 0.0
  %674 = vmatpush1.msra.mxu0 0.0
  %675 = vmatprep.subr.mxu0 0.0
  %676 = vmatpush1.msra.mxu0 0.0
  %677 = vmatprep.subr.mxu0 0.0
  %678 = vmatpush1.msra.mxu0 0.0
  %679 = vmatprep.subr.mxu0 0.0
  %680 = vmatpush1.msra.mxu0 0.0
  %681 = vmatprep.subr.mxu0 0.0
  %682 = vmatpush1.msra.mxu0 0.0
  %683 = vmatprep.subr.mxu0 0.0
  %684 = vmatpush1.msra.mxu0 0.0
  %685 = vmatprep.subr.mxu0 0.0
  %686 = vmatpush1.msra.mxu0 0.0
  %687 = vmatprep.subr.mxu0 0.0
  %688 = vmatpush1.msra.mxu0 0.0
  %689 = vmatprep.subr.mxu0 0.0
  %690 = vmatpush1.msra.mxu0 0.0
  %691 = vmatprep.subr.mxu0 0.0
  %692 = vmatpush1.msra.mxu0 0.0
  %693 = vmatprep.subr.mxu0 0.0
  %694 = vmatpush1.msra.mxu0 0.0
  %695 = vmatprep.subr.mxu0 0.0
  %696 = vmatpush1.msra.mxu0 0.0
  %697 = vmatprep.subr.mxu0 0.0
  %698 = vmatpush1.msra.mxu0 0.0
  %699 = vmatprep.subr.mxu0 0.0
  %700 = vmatpush1.msra.mxu0 0.0
  %701 = vmatprep.subr.mxu0 0.0
  %702 = vmatpush1.msra.mxu0 0.0
  %703 = vmatprep.subr.mxu0 0.0
  %704 = vmatpush1.msra.mxu0 0.0
  %705 = vmatprep.subr.mxu0 0.0
  %706 = vmatpush1.msra.mxu0 0.0
  %707 = vmatprep.subr.mxu0 0.0
  %708 = vmatpush1.msra.mxu0 0.0
  %709 = vmatprep.subr.mxu0 0.0
  %710 = vmatpush1.msra.mxu0 0.0
  %711 = vmatprep.subr.mxu0 0.0
  %712 = vmatpush1.msra.mxu0 0.0
  %713 = vmatprep.subr.mxu0 0.0
  %714 = vmatpush1.msra.mxu0 0.0
  %715 = vmatprep.subr.mxu0 0.0
  %716 = vmatpush1.msra.mxu0 0.0
  %717 = vmatprep.subr.mxu0 0.0
  %718 = vmatpush1.msra.mxu0 0.0
  %719 = vmatprep.subr.mxu0 0.0
  %720 = vmatpush1.msra.mxu0 0.0
  %721 = vmatprep.subr.mxu0 0.0
  %722 = vmatpush1.msra.mxu0 0.0
  %723 = vmatprep.subr.mxu0 0.0
  %724 = vmatpush1.msra.mxu0 0.0
  %725 = vmatprep.subr.mxu0 0.0
  %726 = vmatpush1.msra.mxu0 0.0
  %727 = vmatprep.subr.mxu0 0.0
  %728 = vmatpush1.msra.mxu0 0.0
  %729 = vmatprep.subr.mxu0 0.0
  %730 = vmatpush1.msra.mxu0 0.0
  %731 = vmatprep.mubr.f32.mxu0 0.0
  %732 = vmatmul.mubr.f32.gmra.mrb[0].mxu0 %v665
  %v733 = vpop.f32.mrb[0].mxu0
  %v734 = vadd.f32 %v95, %v733
  %v735 = vpop.f32.mrb[0].mxu0
  %736 = vdwg.mxu0
  %v737 = vxor.u32 %v734, 2147483648
  %v738 = vmul.f32 %v737, 1.442695
  %v739 = vpow.pop %v738
  %v740 = vadd.f32 %v739, 1.0
  %v741 = vrcp.pop %v740
  %v742 = vmul.f32 1.0, %v741
  %744 = vset.pattern.permute.xlu0 0
  %745 = vperm.xlu0 %744, %v742
  %v746 = vpop.permute.xlu0 %745
  %v748 = vsel %vm96, %v746, %v20
  %749 = vmatprep.subr.mxu0 0.0
  %750 = vmatpush1.msra.mxu0 %v748
  %751 = vmatprep.subr.mxu0 0.0
  %752 = vmatpush1.msra.mxu0 0.0
  %753 = vmatprep.subr.mxu0 0.0
  %754 = vmatpush1.msra.mxu0 0.0
  %755 = vmatprep.subr.mxu0 0.0
  %756 = vmatpush1.msra.mxu0 0.0
  %757 = vmatprep.subr.mxu0 0.0
  %758 = vmatpush1.msra.mxu0 0.0
  %759 = vmatprep.subr.mxu0 0.0
  %760 = vmatpush1.msra.mxu0 0.0
  %761 = vmatprep.subr.mxu0 0.0
  %762 = vmatpush1.msra.mxu0 0.0
  %763 = vmatprep.subr.mxu0 0.0
  %764 = vmatpush1.msra.mxu0 0.0
  %765 = vmatprep.subr.mxu0 0.0
  %766 = vmatpush1.msra.mxu0 0.0
  %767 = vmatprep.subr.mxu0 0.0
  %768 = vmatpush1.msra.mxu0 0.0
  %769 = vmatprep.subr.mxu0 0.0
  %770 = vmatpush1.msra.mxu0 0.0
  %771 = vmatprep.subr.mxu0 0.0
  %772 = vmatpush1.msra.mxu0 0.0
  %773 = vmatprep.subr.mxu0 0.0
  %774 = vmatpush1.msra.mxu0 0.0
  %775 = vmatprep.subr.mxu0 0.0
  %776 = vmatpush1.msra.mxu0 0.0
  %777 = vmatprep.subr.mxu0 0.0
  %778 = vmatpush1.msra.mxu0 0.0
  %779 = vmatprep.subr.mxu0 0.0
  %780 = vmatpush1.msra.mxu0 0.0
  %781 = vmatprep.subr.mxu0 0.0
  %782 = vmatpush1.msra.mxu0 0.0
  %783 = vmatprep.subr.mxu0 0.0
  %784 = vmatpush1.msra.mxu0 0.0
  %785 = vmatprep.subr.mxu0 0.0
  %786 = vmatpush1.msra.mxu0 0.0
  %787 = vmatprep.subr.mxu0 0.0
  %788 = vmatpush1.msra.mxu0 0.0
  %789 = vmatprep.subr.mxu0 0.0
  %790 = vmatpush1.msra.mxu0 0.0
  %791 = vmatprep.subr.mxu0 0.0
  %792 = vmatpush1.msra.mxu0 0.0
  %793 = vmatprep.subr.mxu0 0.0
  %794 = vmatpush1.msra.mxu0 0.0
  %795 = vmatprep.subr.mxu0 0.0
  %796 = vmatpush1.msra.mxu0 0.0
  %797 = vmatprep.subr.mxu0 0.0
  %798 = vmatpush1.msra.mxu0 0.0
  %799 = vmatprep.subr.mxu0 0.0
  %800 = vmatpush1.msra.mxu0 0.0
  %801 = vmatprep.subr.mxu0 0.0
  %802 = vmatpush1.msra.mxu0 0.0
  %803 = vmatprep.subr.mxu0 0.0
  %804 = vmatpush1.msra.mxu0 0.0
  %805 = vmatprep.subr.mxu0 0.0
  %806 = vmatpush1.msra.mxu0 0.0
  %807 = vmatprep.subr.mxu0 0.0
  %808 = vmatpush1.msra.mxu0 0.0
  %809 = vmatprep.subr.mxu0 0.0
  %810 = vmatpush1.msra.mxu0 0.0
  %811 = vmatprep.subr.mxu0 0.0
  %812 = vmatpush1.msra.mxu0 0.0
  %813 = vmatprep.mubr.f32.mxu0 0.0
  %814 = vmatmul.mubr.f32.gmra.mrb[0].mxu0 %v99
  %v815 = vpop.f32.mrb[0].mxu0
  %v816 = vadd.f32 0.0, %v815
  %v817 = vpop.f32.mrb[0].mxu0
  %818 = vmatprep.mubr.f32.mxu0 0.0
  %819 = vmatmul.mubr.f32.gmra.mrb[0].mxu0 %v102
  %v820 = vpop.f32.mrb[0].mxu0
  %v821 = vadd.f32 0.0, %v820
  %v822 = vpop.f32.mrb[0].mxu0
  %823 = vdwg.mxu0
  %v825 = vsel %vm179, %v816, 0
  %v828 = vsel %vm179, %v821, 0
  %830 = vmatprep.subr.mxu0 0.0
  %831 = vmatpush1.msra.mxu0 %v188
  %832 = vmatprep.subr.mxu0 0.0
  %833 = vmatpush1.msra.mxu0 0.0
  %834 = vmatprep.subr.mxu0 0.0
  %835 = vmatpush1.msra.mxu0 0.0
  %836 = vmatprep.subr.mxu0 0.0
  %837 = vmatpush1.msra.mxu0 0.0
  %838 = vmatprep.subr.mxu0 0.0
  %839 = vmatpush1.msra.mxu0 0.0
  %840 = vmatprep.subr.mxu0 0.0
  %841 = vmatpush1.msra.mxu0 0.0
  %842 = vmatprep.subr.mxu0 0.0
  %843 = vmatpush1.msra.mxu0 0.0
  %844 = vmatprep.subr.mxu0 0.0
  %845 = vmatpush1.msra.mxu0 0.0
  %846 = vmatprep.subr.mxu0 0.0
  %847 = vmatpush1.msra.mxu0 0.0
  %848 = vmatprep.subr.mxu0 0.0
  %849 = vmatpush1.msra.mxu0 0.0
  %850 = vmatprep.subr.mxu0 0.0
  %851 = vmatpush1.msra.mxu0 0.0
  %852 = vmatprep.subr.mxu0 0.0
  %853 = vmatpush1.msra.mxu0 0.0
  %854 = vmatprep.subr.mxu0 0.0
  %855 = vmatpush1.msra.mxu0 0.0
  %856 = vmatprep.subr.mxu0 0.0
  %857 = vmatpush1.msra.mxu0 0.0
  %858 = vmatprep.subr.mxu0 0.0
  %859 = vmatpush1.msra.mxu0 0.0
  %860 = vmatprep.subr.mxu0 0.0
  %861 = vmatpush1.msra.mxu0 0.0
  %862 = vmatprep.subr.mxu0 0.0
  %863 = vmatpush1.msra.mxu0 0.0
  %864 = vmatprep.subr.mxu0 0.0
  %865 = vmatpush1.msra.mxu0 0.0
  %866 = vmatprep.subr.mxu0 0.0
  %867 = vmatpush1.msra.mxu0 0.0
  %868 = vmatprep.subr.mxu0 0.0
  %869 = vmatpush1.msra.mxu0 0.0
  %870 = vmatprep.subr.mxu0 0.0
  %871 = vmatpush1.msra.mxu0 0.0
  %872 = vmatprep.subr.mxu0 0.0
  %873 = vmatpush1.msra.mxu0 0.0
  %874 = vmatprep.subr.mxu0 0.0
  %875 = vmatpush1.msra.mxu0 0.0
  %876 = vmatprep.subr.mxu0 0.0
  %877 = vmatpush1.msra.mxu0 0.0
  %878 = vmatprep.subr.mxu0 0.0
  %879 = vmatpush1.msra.mxu0 0.0
  %880 = vmatprep.subr.mxu0 0.0
  %881 = vmatpush1.msra.mxu0 0.0
  %882 = vmatprep.subr.mxu0 0.0
  %883 = vmatpush1.msra.mxu0 0.0
  %884 = vmatprep.subr.mxu0 0.0
  %885 = vmatpush1.msra.mxu0 0.0
  %886 = vmatprep.subr.mxu0 0.0
  %887 = vmatpush1.msra.mxu0 0.0
  %888 = vmatprep.subr.mxu0 0.0
  %889 = vmatpush1.msra.mxu0 0.0
  %890 = vmatprep.subr.mxu0 0.0
  %891 = vmatpush1.msra.mxu0 0.0
  %892 = vmatprep.subr.mxu0 0.0
  %893 = vmatpush1.msra.mxu0 0.0
  %894 = vmatprep.mubr.f32.mxu0 0.0
  %895 = vmatmul.mubr.f32.gmra.mrb[0].mxu0 %v825
  %v896 = vpop.f32.mrb[0].mxu0
  %v897 = vadd.f32 %v82, %v896
  %v898 = vpop.f32.mrb[0].mxu0
  %899 = vmatprep.mubr.f32.mxu0 0.0
  %900 = vmatmul.mubr.f32.gmra.mrb[0].mxu0 %v828
  %v901 = vpop.f32.mrb[0].mxu0
  %v902 = vadd.f32 %v83, %v901
  %v903 = vpop.f32.mrb[0].mxu0
  %904 = vdwg.mxu0
  %v905 = vmax.f32 %v897, 0.0
  %v906 = vmax.f32 %v902, 0.0
  %v908 = vsel %vm267, %v905, 0
  %v911 = vsel %vm267, %v906, 0
  %913 = vmatprep.subr.mxu0 0.0
  %914 = vmatpush1.msra.mxu0 %v29
  %915 = vmatprep.subr.mxu0 0.0
  %916 = vmatpush1.msra.mxu0 %v30
  %917 = vmatprep.subr.mxu0 0.0
  %918 = vmatpush1.msra.mxu0 0.0
  %919 = vmatprep.subr.mxu0 0.0
  %920 = vmatpush1.msra.mxu0 0.0
  %921 = vmatprep.subr.mxu0 0.0
  %922 = vmatpush1.msra.mxu0 0.0
  %923 = vmatprep.subr.mxu0 0.0
  %924 = vmatpush1.msra.mxu0 0.0
  %925 = vmatprep.subr.mxu0 0.0
  %926 = vmatpush1.msra.mxu0 0.0
  %927 = vmatprep.subr.mxu0 0.0
  %928 = vmatpush1.msra.mxu0 0.0
  %929 = vmatprep.subr.mxu0 0.0
  %930 = vmatpush1.msra.mxu0 0.0
  %931 = vmatprep.subr.mxu0 0.0
  %932 = vmatpush1.msra.mxu0 0.0
  %933 = vmatprep.subr.mxu0 0.0
  %934 = vmatpush1.msra.mxu0 0.0
  %935 = vmatprep.subr.mxu0 0.0
  %936 = vmatpush1.msra.mxu0 0.0
  %937 = vmatprep.subr.mxu0 0.0
  %938 = vmatpush1.msra.mxu0 0.0
  %939 = vmatprep.subr.mxu0 0.0
  %940 = vmatpush1.msra.mxu0 0.0
  %941 = vmatprep.subr.mxu0 0.0
  %942 = vmatpush1.msra.mxu0 0.0
  %943 = vmatprep.subr.mxu0 0.0
  %944 = vmatpush1.msra.mxu0 0.0
  %945 = vmatprep.subr.mxu0 0.0
  %946 = vmatpush1.msra.mxu0 0.0
  %947 = vmatprep.subr.mxu0 0.0
  %948 = vmatpush1.msra.mxu0 0.0
  %949 = vmatprep.subr.mxu0 0.0
  %950 = vmatpush1.msra.mxu0 0.0
  %951 = vmatprep.subr.mxu0 0.0
  %952 = vmatpush1.msra.mxu0 0.0
  %953 = vmatprep.subr.mxu0 0.0
  %954 = vmatpush1.msra.mxu0 0.0
  %955 = vmatprep.subr.mxu0 0.0
  %956 = vmatpush1.msra.mxu0 0.0
  %957 = vmatprep.subr.mxu0 0.0
  %958 = vmatpush1.msra.mxu0 0.0
  %959 = vmatprep.subr.mxu0 0.0
  %960 = vmatpush1.msra.mxu0 0.0
  %961 = vmatprep.subr.mxu0 0.0
  %962 = vmatpush1.msra.mxu0 0.0
  %963 = vmatprep.subr.mxu0 0.0
  %964 = vmatpush1.msra.mxu0 0.0
  %965 = vmatprep.subr.mxu0 0.0
  %966 = vmatpush1.msra.mxu0 0.0
  %967 = vmatprep.subr.mxu0 0.0
  %968 = vmatpush1.msra.mxu0 0.0
  %969 = vmatprep.subr.mxu0 0.0
  %970 = vmatpush1.msra.mxu0 0.0
  %971 = vmatprep.subr.mxu0 0.0
  %972 = vmatpush1.msra.mxu0 0.0
  %973 = vmatprep.subr.mxu0 0.0
  %974 = vmatpush1.msra.mxu0 0.0
  %975 = vmatprep.subr.mxu0 0.0
  %976 = vmatpush1.msra.mxu0 0.0
  %977 = vmatprep.mubr.f32.mxu0 0.0
  %978 = vmatmul.mubr.f32.gmra.mrb[0].mxu0 %v908
  %v979 = vpop.f32.mrb[0].mxu0
  %v980 = vadd.f32 %v87, %v979
  %v981 = vpop.f32.mrb[0].mxu0
  %982 = vmatprep.mubr.f32.mxu0 0.0
  %983 = vmatmul.mubr.f32.gmra.mrb[0].mxu0 %v911
  %v984 = vpop.f32.mrb[0].mxu0
  %v985 = vadd.f32 %v87, %v984
  %v986 = vpop.f32.mrb[0].mxu0
  %987 = vdwg.mxu0
  %v988 = vmax.f32 %v980, 0.0
  %v989 = vmax.f32 %v985, 0.0
  %v990 = vlaneseq
  %v991 = vshrl.u32 %v990, 7
  %v992 = vsub.s32 0, %v991
  %v993 = vrot.slane %v988, %v992
  %v994 = vsel %vm355, %v993, 0.0
  %v995 = vmax.f32 %v994, 0.0
  %v996 = vlaneseq
  %v997 = vshrl.u32 %v996, 7
  %v998 = vsub.s32 1, %v997
  %v999 = vrot.slane %v988, %v998
  %v1000 = vsel %vm365, %v999, 0.0
  %v1001 = vmax.f32 %v995, %v1000
  %v1002 = vlaneseq
  %v1003 = vshrl.u32 %v1002, 7
  %v1004 = vsub.s32 2, %v1003
  %v1005 = vrot.slane %v988, %v1004
  %v1006 = vsel %vm375, %v1005, 0.0
  %v1007 = vmax.f32 %v1001, %v1006
  %v1008 = vlaneseq
  %v1009 = vshrl.u32 %v1008, 7
  %v1010 = vsub.s32 3, %v1009
  %v1011 = vrot.slane %v988, %v1010
  %v1012 = vsel %vm385, %v1011, 0.0
  %v1013 = vmax.f32 %v1007, %v1012
  %v1014 = vlaneseq
  %v1015 = vshrl.u32 %v1014, 7
  %v1016 = vsub.s32 4, %v1015
  %v1017 = vrot.slane %v988, %v1016
  %v1018 = vsel %vm395, %v1017, 0.0
  %v1019 = vmax.f32 %v1013, %v1018
  %v1020 = vlaneseq
  %v1021 = vshrl.u32 %v1020, 7
  %v1022 = vsub.s32 5, %v1021
  %v1023 = vrot.slane %v988, %v1022
  %v1024 = vsel %vm405, %v1023, 0.0
  %v1025 = vmax.f32 %v1019, %v1024
  %v1026 = vlaneseq
  %v1027 = vshrl.u32 %v1026, 7
  %v1028 = vsub.s32 6, %v1027
  %v1029 = vrot.slane %v988, %v1028
  %v1030 = vsel %vm415, %v1029, 0.0
  %v1031 = vmax.f32 %v1025, %v1030
  %v1032 = vlaneseq
  %v1033 = vshrl.u32 %v1032, 7
  %v1034 = vsub.s32 7, %v1033
  %v1035 = vrot.slane %v988, %v1034
  %v1036 = vsel %vm425, %v1035, 0.0
  %v1037 = vmax.f32 %v1031, %v1036
  %v1038 = vlaneseq
  %v1039 = vshrl.u32 %v1038, 7
  %v1040 = vsub.s32 0, %v1039
  %v1041 = vrot.slane %v989, %v1040
  %v1042 = vsel %vm435, %v1041, 0.0
  %v1043 = vmax.f32 %v1037, %v1042
  %v1044 = vlaneseq
  %v1045 = vshrl.u32 %v1044, 7
  %v1046 = vsub.s32 1, %v1045
  %v1047 = vrot.slane %v989, %v1046
  %v1048 = vsel %vm445, %v1047, 0.0
  %v1049 = vmax.f32 %v1043, %v1048
  %v1050 = vlaneseq
  %v1051 = vshrl.u32 %v1050, 7
  %v1052 = vsub.s32 2, %v1051
  %v1053 = vrot.slane %v989, %v1052
  %v1054 = vsel %vm455, %v1053, 0.0
  %v1055 = vmax.f32 %v1049, %v1054
  %v1056 = vlaneseq
  %v1057 = vshrl.u32 %v1056, 7
  %v1058 = vsub.s32 3, %v1057
  %v1059 = vrot.slane %v989, %v1058
  %v1060 = vsel %vm465, %v1059, 0.0
  %v1061 = vmax.f32 %v1055, %v1060
  %v1062 = vlaneseq
  %v1063 = vshrl.u32 %v1062, 7
  %v1064 = vsub.s32 4, %v1063
  %v1065 = vrot.slane %v989, %v1064
  %v1066 = vsel %vm475, %v1065, 0.0
  %v1067 = vmax.f32 %v1061, %v1066
  %v1068 = vlaneseq
  %v1069 = vshrl.u32 %v1068, 7
  %v1070 = vsub.s32 5, %v1069
  %v1071 = vrot.slane %v989, %v1070
  %v1072 = vsel %vm485, %v1071, 0.0
  %v1073 = vmax.f32 %v1067, %v1072
  %v1074 = vlaneseq
  %v1075 = vshrl.u32 %v1074, 7
  %v1076 = vsub.s32 6, %v1075
  %v1077 = vrot.slane %v989, %v1076
  %v1078 = vsel %vm495, %v1077, 0.0
  %v1079 = vmax.f32 %v1073, %v1078
  %v1080 = vlaneseq
  %v1081 = vshrl.u32 %v1080, 7
  %v1082 = vsub.s32 7, %v1081
  %v1083 = vrot.slane %v989, %v1082
  %v1084 = vsel %vm505, %v1083, 0.0
  %v1085 = vmax.f32 %v1079, %v1084
  %v1087 = vsel %vm512, %v1085, 0
  %1089 = vmatprep.subr.mxu0 0.0
  %1090 = vmatpush1.msra.mxu0 %v33
  %1091 = vmatprep.subr.mxu0 0.0
  %1092 = vmatpush1.msra.mxu0 %v34
  %1093 = vmatprep.subr.mxu0 0.0
  %1094 = vmatpush1.msra.mxu0 %v35
  %1095 = vmatprep.subr.mxu0 0.0
  %1096 = vmatpush1.msra.mxu0 %v36
  %1097 = vmatprep.subr.mxu0 0.0
  %1098 = vmatpush1.msra.mxu0 0.0
  %1099 = vmatprep.subr.mxu0 0.0
  %1100 = vmatpush1.msra.mxu0 0.0
  %1101 = vmatprep.subr.mxu0 0.0
  %1102 = vmatpush1.msra.mxu0 0.0
  %1103 = vmatprep.subr.mxu0 0.0
  %1104 = vmatpush1.msra.mxu0 0.0
  %1105 = vmatprep.subr.mxu0 0.0
  %1106 = vmatpush1.msra.mxu0 0.0
  %1107 = vmatprep.subr.mxu0 0.0
  %1108 = vmatpush1.msra.mxu0 0.0
  %1109 = vmatprep.subr.mxu0 0.0
  %1110 = vmatpush1.msra.mxu0 0.0
  %1111 = vmatprep.subr.mxu0 0.0
  %1112 = vmatpush1.msra.mxu0 0.0
  %1113 = vmatprep.subr.mxu0 0.0
  %1114 = vmatpush1.msra.mxu0 0.0
  %1115 = vmatprep.subr.mxu0 0.0
  %1116 = vmatpush1.msra.mxu0 0.0
  %1117 = vmatprep.subr.mxu0 0.0
  %1118 = vmatpush1.msra.mxu0 0.0
  %1119 = vmatprep.subr.mxu0 0.0
  %1120 = vmatpush1.msra.mxu0 0.0
  %1121 = vmatprep.subr.mxu0 0.0
  %1122 = vmatpush1.msra.mxu0 0.0
  %1123 = vmatprep.subr.mxu0 0.0
  %1124 = vmatpush1.msra.mxu0 0.0
  %1125 = vmatprep.subr.mxu0 0.0
  %1126 = vmatpush1.msra.mxu0 0.0
  %1127 = vmatprep.subr.mxu0 0.0
  %1128 = vmatpush1.msra.mxu0 0.0
  %1129 = vmatprep.subr.mxu0 0.0
  %1130 = vmatpush1.msra.mxu0 0.0
  %1131 = vmatprep.subr.mxu0 0.0
  %1132 = vmatpush1.msra.mxu0 0.0
  %1133 = vmatprep.subr.mxu0 0.0
  %1134 = vmatpush1.msra.mxu0 0.0
  %1135 = vmatprep.subr.mxu0 0.0
  %1136 = vmatpush1.msra.mxu0 0.0
  %1137 = vmatprep.subr.mxu0 0.0
  %1138 = vmatpush1.msra.mxu0 0.0
  %1139 = vmatprep.subr.mxu0 0.0
  %1140 = vmatpush1.msra.mxu0 0.0
  %1141 = vmatprep.subr.mxu0 0.0
  %1142 = vmatpush1.msra.mxu0 0.0
  %1143 = vmatprep.subr.mxu0 0.0
  %1144 = vmatpush1.msra.mxu0 0.0
  %1145 = vmatprep.subr.mxu0 0.0
  %1146 = vmatpush1.msra.mxu0 0.0
  %1147 = vmatprep.subr.mxu0 0.0
  %1148 = vmatpush1.msra.mxu0 0.0
  %1149 = vmatprep.subr.mxu0 0.0
  %1150 = vmatpush1.msra.mxu0 0.0
  %1151 = vmatprep.subr.mxu0 0.0
  %1152 = vmatpush1.msra.mxu0 0.0
  %1153 = vmatprep.mubr.f32.mxu0 0.0
  %1154 = vmatmul.mubr.f32.gmra.mrb[0].mxu0 %v1087
  %v1155 = vpop.f32.mrb[0].mxu0
  %v1156 = vadd.f32 0.0, %v1155
  %v1157 = vpop.f32.mrb[0].mxu0
  %1158 = vdwg.mxu0
  %v1160 = vsel %vm179, %v748, 0
  %1162 = vmatprep.subr.mxu0 0.0
  %1163 = vmatpush1.msra.mxu0 %v590
  %1164 = vmatprep.subr.mxu0 0.0
  %1165 = vmatpush1.msra.mxu0 0.0
  %1166 = vmatprep.subr.mxu0 0.0
  %1167 = vmatpush1.msra.mxu0 0.0
  %1168 = vmatprep.subr.mxu0 0.0
  %1169 = vmatpush1.msra.mxu0 0.0
  %1170 = vmatprep.subr.mxu0 0.0
  %1171 = vmatpush1.msra.mxu0 0.0
  %1172 = vmatprep.subr.mxu0 0.0
  %1173 = vmatpush1.msra.mxu0 0.0
  %1174 = vmatprep.subr.mxu0 0.0
  %1175 = vmatpush1.msra.mxu0 0.0
  %1176 = vmatprep.subr.mxu0 0.0
  %1177 = vmatpush1.msra.mxu0 0.0
  %1178 = vmatprep.subr.mxu0 0.0
  %1179 = vmatpush1.msra.mxu0 0.0
  %1180 = vmatprep.subr.mxu0 0.0
  %1181 = vmatpush1.msra.mxu0 0.0
  %1182 = vmatprep.subr.mxu0 0.0
  %1183 = vmatpush1.msra.mxu0 0.0
  %1184 = vmatprep.subr.mxu0 0.0
  %1185 = vmatpush1.msra.mxu0 0.0
  %1186 = vmatprep.subr.mxu0 0.0
  %1187 = vmatpush1.msra.mxu0 0.0
  %1188 = vmatprep.subr.mxu0 0.0
  %1189 = vmatpush1.msra.mxu0 0.0
  %1190 = vmatprep.subr.mxu0 0.0
  %1191 = vmatpush1.msra.mxu0 0.0
  %1192 = vmatprep.subr.mxu0 0.0
  %1193 = vmatpush1.msra.mxu0 0.0
  %1194 = vmatprep.subr.mxu0 0.0
  %1195 = vmatpush1.msra.mxu0 0.0
  %1196 = vmatprep.subr.mxu0 0.0
  %1197 = vmatpush1.msra.mxu0 0.0
  %1198 = vmatprep.subr.mxu0 0.0
  %1199 = vmatpush1.msra.mxu0 0.0
  %1200 = vmatprep.subr.mxu0 0.0
  %1201 = vmatpush1.msra.mxu0 0.0
  %1202 = vmatprep.subr.mxu0 0.0
  %1203 = vmatpush1.msra.mxu0 0.0
  %1204 = vmatprep.subr.mxu0 0.0
  %1205 = vmatpush1.msra.mxu0 0.0
  %1206 = vmatprep.subr.mxu0 0.0
  %1207 = vmatpush1.msra.mxu0 0.0
  %1208 = vmatprep.subr.mxu0 0.0
  %1209 = vmatpush1.msra.mxu0 0.0
  %1210 = vmatprep.subr.mxu0 0.0
  %1211 = vmatpush1.msra.mxu0 0.0
  %1212 = vmatprep.subr.mxu0 0.0
  %1213 = vmatpush1.msra.mxu0 0.0
  %1214 = vmatprep.subr.mxu0 0.0
  %1215 = vmatpush1.msra.mxu0 0.0
  %1216 = vmatprep.subr.mxu0 0.0
  %1217 = vmatpush1.msra.mxu0 0.0
  %1218 = vmatprep.subr.mxu0 0.0
  %1219 = vmatpush1.msra.mxu0 0.0
  %1220 = vmatprep.subr.mxu0 0.0
  %1221 = vmatpush1.msra.mxu0 0.0
  %1222 = vmatprep.subr.mxu0 0.0
  %1223 = vmatpush1.msra.mxu0 0.0
  %1224 = vmatprep.subr.mxu0 0.0
  %1225 = vmatpush1.msra.mxu0 0.0
  %1226 = vmatprep.mubr.f32.mxu0 0.0
  %1227 = vmatmul.mubr.f32.gmra.mrb[0].mxu0 %v1160
  %v1228 = vpop.f32.mrb[0].mxu0
  %v1229 = vadd.f32 %v1156, %v1228
  %v1230 = vpop.f32.mrb[0].mxu0
  %1231 = vdwg.mxu0
  %v1232 = vadd.f32 %v1229, %v91
  %v1233 = vmax.f32 %v1232, 0.0
  %v1235 = vsel %vm267, %v1233, 0
  %1237 = vmatprep.subr.mxu0 0.0
  %1238 = vmatpush1.msra.mxu0 %v38
  %1239 = vmatprep.subr.mxu0 0.0
  %1240 = vmatpush1.msra.mxu0 %v39
  %1241 = vmatprep.subr.mxu0 0.0
  %1242 = vmatpush1.msra.mxu0 0.0
  %1243 = vmatprep.subr.mxu0 0.0
  %1244 = vmatpush1.msra.mxu0 0.0
  %1245 = vmatprep.subr.mxu0 0.0
  %1246 = vmatpush1.msra.mxu0 0.0
  %1247 = vmatprep.subr.mxu0 0.0
  %1248 = vmatpush1.msra.mxu0 0.0
  %1249 = vmatprep.subr.mxu0 0.0
  %1250 = vmatpush1.msra.mxu0 0.0
  %1251 = vmatprep.subr.mxu0 0.0
  %1252 = vmatpush1.msra.mxu0 0.0
  %1253 = vmatprep.subr.mxu0 0.0
  %1254 = vmatpush1.msra.mxu0 0.0
  %1255 = vmatprep.subr.mxu0 0.0
  %1256 = vmatpush1.msra.mxu0 0.0
  %1257 = vmatprep.subr.mxu0 0.0
  %1258 = vmatpush1.msra.mxu0 0.0
  %1259 = vmatprep.subr.mxu0 0.0
  %1260 = vmatpush1.msra.mxu0 0.0
  %1261 = vmatprep.subr.mxu0 0.0
  %1262 = vmatpush1.msra.mxu0 0.0
  %1263 = vmatprep.subr.mxu0 0.0
  %1264 = vmatpush1.msra.mxu0 0.0
  %1265 = vmatprep.subr.mxu0 0.0
  %1266 = vmatpush1.msra.mxu0 0.0
  %1267 = vmatprep.subr.mxu0 0.0
  %1268 = vmatpush1.msra.mxu0 0.0
  %1269 = vmatprep.subr.mxu0 0.0
  %1270 = vmatpush1.msra.mxu0 0.0
  %1271 = vmatprep.subr.mxu0 0.0
  %1272 = vmatpush1.msra.mxu0 0.0
  %1273 = vmatprep.subr.mxu0 0.0
  %1274 = vmatpush1.msra.mxu0 0.0
  %1275 = vmatprep.subr.mxu0 0.0
  %1276 = vmatpush1.msra.mxu0 0.0
  %1277 = vmatprep.subr.mxu0 0.0
  %1278 = vmatpush1.msra.mxu0 0.0
  %1279 = vmatprep.subr.mxu0 0.0
  %1280 = vmatpush1.msra.mxu0 0.0
  %1281 = vmatprep.subr.mxu0 0.0
  %1282 = vmatpush1.msra.mxu0 0.0
  %1283 = vmatprep.subr.mxu0 0.0
  %1284 = vmatpush1.msra.mxu0 0.0
  %1285 = vmatprep.subr.mxu0 0.0
  %1286 = vmatpush1.msra.mxu0 0.0
  %1287 = vmatprep.subr.mxu0 0.0
  %1288 = vmatpush1.msra.mxu0 0.0
  %1289 = vmatprep.subr.mxu0 0.0
  %1290 = vmatpush1.msra.mxu0 0.0
  %1291 = vmatprep.subr.mxu0 0.0
  %1292 = vmatpush1.msra.mxu0 0.0
  %1293 = vmatprep.subr.mxu0 0.0
  %1294 = vmatpush1.msra.mxu0 0.0
  %1295 = vmatprep.subr.mxu0 0.0
  %1296 = vmatpush1.msra.mxu0 0.0
  %1297 = vmatprep.subr.mxu0 0.0
  %1298 = vmatpush1.msra.mxu0 0.0
  %1299 = vmatprep.subr.mxu0 0.0
  %1300 = vmatpush1.msra.mxu0 0.0
  %1301 = vmatprep.mubr.f32.mxu0 0.0
  %1302 = vmatmul.mubr.f32.gmra.mrb[0].mxu0 %v1235
  %v1303 = vpop.f32.mrb[0].mxu0
  %v1304 = vadd.f32 %v95, %v1303
  %v1305 = vpop.f32.mrb[0].mxu0
  %1306 = vdwg.mxu0
  %v1307 = vxor.u32 %v1304, 2147483648
  %v1308 = vmul.f32 %v1307, 1.442695
  %v1309 = vpow.pop %v1308
  %v1310 = vadd.f32 %v1309, 1.0
  %v1311 = vrcp.pop %v1310
  %v1312 = vmul.f32 1.0, %v1311
  %1314 = vset.pattern.permute.xlu0 0
  %1315 = vperm.xlu0 %1314, %v1312
  %v1316 = vpop.permute.xlu0 %1315
  %v1318 = vsel %vm96, %v1316, %v20
  %1319 = vmatprep.subr.mxu0 0.0
  %1320 = vmatpush1.msra.mxu0 %v1318
  %1321 = vmatprep.subr.mxu0 0.0
  %1322 = vmatpush1.msra.mxu0 0.0
  %1323 = vmatprep.subr.mxu0 0.0
  %1324 = vmatpush1.msra.mxu0 0.0
  %1325 = vmatprep.subr.mxu0 0.0
  %1326 = vmatpush1.msra.mxu0 0.0
  %1327 = vmatprep.subr.mxu0 0.0
  %1328 = vmatpush1.msra.mxu0 0.0
  %1329 = vmatprep.subr.mxu0 0.0
  %1330 = vmatpush1.msra.mxu0 0.0
  %1331 = vmatprep.subr.mxu0 0.0
  %1332 = vmatpush1.msra.mxu0 0.0
  %1333 = vmatprep.subr.mxu0 0.0
  %1334 = vmatpush1.msra.mxu0 0.0
  %1335 = vmatprep.subr.mxu0 0.0
  %1336 = vmatpush1.msra.mxu0 0.0
  %1337 = vmatprep.subr.mxu0 0.0
  %1338 = vmatpush1.msra.mxu0 0.0
  %1339 = vmatprep.subr.mxu0 0.0
  %1340 = vmatpush1.msra.mxu0 0.0
  %1341 = vmatprep.subr.mxu0 0.0
  %1342 = vmatpush1.msra.mxu0 0.0
  %1343 = vmatprep.subr.mxu0 0.0
  %1344 = vmatpush1.msra.mxu0 0.0
  %1345 = vmatprep.subr.mxu0 0.0
  %1346 = vmatpush1.msra.mxu0 0.0
  %1347 = vmatprep.subr.mxu0 0.0
  %1348 = vmatpush1.msra.mxu0 0.0
  %1349 = vmatprep.subr.mxu0 0.0
  %1350 = vmatpush1.msra.mxu0 0.0
  %1351 = vmatprep.subr.mxu0 0.0
  %1352 = vmatpush1.msra.mxu0 0.0
  %1353 = vmatprep.subr.mxu0 0.0
  %1354 = vmatpush1.msra.mxu0 0.0
  %1355 = vmatprep.subr.mxu0 0.0
  %1356 = vmatpush1.msra.mxu0 0.0
  %1357 = vmatprep.subr.mxu0 0.0
  %1358 = vmatpush1.msra.mxu0 0.0
  %1359 = vmatprep.subr.mxu0 0.0
  %1360 = vmatpush1.msra.mxu0 0.0
  %1361 = vmatprep.subr.mxu0 0.0
  %1362 = vmatpush1.msra.mxu0 0.0
  %1363 = vmatprep.subr.mxu0 0.0
  %1364 = vmatpush1.msra.mxu0 0.0
  %1365 = vmatprep.subr.mxu0 0.0
  %1366 = vmatpush1.msra.mxu0 0.0
  %1367 = vmatprep.subr.mxu0 0.0
  %1368 = vmatpush1.msra.mxu0 0.0
  %1369 = vmatprep.subr.mxu0 0.0
  %1370 = vmatpush1.msra.mxu0 0.0
  %1371 = vmatprep.subr.mxu0 0.0
  %1372 = vmatpush1.msra.mxu0 0.0
  %1373 = vmatprep.subr.mxu0 0.0
  %1374 = vmatpush1.msra.mxu0 0.0
  %1375 = vmatprep.subr.mxu0 0.0
  %1376 = vmatpush1.msra.mxu0 0.0
  %1377 = vmatprep.subr.mxu0 0.0
  %1378 = vmatpush1.msra.mxu0 0.0
  %1379 = vmatprep.subr.mxu0 0.0
  %1380 = vmatpush1.msra.mxu0 0.0
  %1381 = vmatprep.subr.mxu0 0.0
  %1382 = vmatpush1.msra.mxu0 0.0
  %1383 = vmatprep.mubr.f32.mxu0 0.0
  %1384 = vmatmul.mubr.f32.gmra.mrb[0].mxu0 %v99
  %v1385 = vpop.f32.mrb[0].mxu0
  %v1386 = vadd.f32 0.0, %v1385
  %v1387 = vpop.f32.mrb[0].mxu0
  %1388 = vmatprep.mubr.f32.mxu0 0.0
  %1389 = vmatmul.mubr.f32.gmra.mrb[0].mxu0 %v102
  %v1390 = vpop.f32.mrb[0].mxu0
  %v1391 = vadd.f32 0.0, %v1390
  %v1392 = vpop.f32.mrb[0].mxu0
  %1393 = vdwg.mxu0
  %v1395 = vsel %vm179, %v1386, 0
  %v1398 = vsel %vm179, %v1391, 0
  %1400 = vmatprep.subr.mxu0 0.0
  %1401 = vmatpush1.msra.mxu0 %v188
  %1402 = vmatprep.subr.mxu0 0.0
  %1403 = vmatpush1.msra.mxu0 0.0
  %1404 = vmatprep.subr.mxu0 0.0
  %1405 = vmatpush1.msra.mxu0 0.0
  %1406 = vmatprep.subr.mxu0 0.0
  %1407 = vmatpush1.msra.mxu0 0.0
  %1408 = vmatprep.subr.mxu0 0.0
  %1409 = vmatpush1.msra.mxu0 0.0
  %1410 = vmatprep.subr.mxu0 0.0
  %1411 = vmatpush1.msra.mxu0 0.0
  %1412 = vmatprep.subr.mxu0 0.0
  %1413 = vmatpush1.msra.mxu0 0.0
  %1414 = vmatprep.subr.mxu0 0.0
  %1415 = vmatpush1.msra.mxu0 0.0
  %1416 = vmatprep.subr.mxu0 0.0
  %1417 = vmatpush1.msra.mxu0 0.0
  %1418 = vmatprep.subr.mxu0 0.0
  %1419 = vmatpush1.msra.mxu0 0.0
  %1420 = vmatprep.subr.mxu0 0.0
  %1421 = vmatpush1.msra.mxu0 0.0
  %1422 = vmatprep.subr.mxu0 0.0
  %1423 = vmatpush1.msra.mxu0 0.0
  %1424 = vmatprep.subr.mxu0 0.0
  %1425 = vmatpush1.msra.mxu0 0.0
  %1426 = vmatprep.subr.mxu0 0.0
  %1427 = vmatpush1.msra.mxu0 0.0
  %1428 = vmatprep.subr.mxu0 0.0
  %1429 = vmatpush1.msra.mxu0 0.0
  %1430 = vmatprep.subr.mxu0 0.0
  %1431 = vmatpush1.msra.mxu0 0.0
  %1432 = vmatprep.subr.mxu0 0.0
  %1433 = vmatpush1.msra.mxu0 0.0
  %1434 = vmatprep.subr.mxu0 0.0
  %1435 = vmatpush1.msra.mxu0 0.0
  %1436 = vmatprep.subr.mxu0 0.0
  %1437 = vmatpush1.msra.mxu0 0.0
  %1438 = vmatprep.subr.mxu0 0.0
  %1439 = vmatpush1.msra.mxu0 0.0
  %1440 = vmatprep.subr.mxu0 0.0
  %1441 = vmatpush1.msra.mxu0 0.0
  %1442 = vmatprep.subr.mxu0 0.0
  %1443 = vmatpush1.msra.mxu0 0.0
  %1444 = vmatprep.subr.mxu0 0.0
  %1445 = vmatpush1.msra.mxu0 0.0
  %1446 = vmatprep.subr.mxu0 0.0
  %1447 = vmatpush1.msra.mxu0 0.0
  %1448 = vmatprep.subr.mxu0 0.0
  %1449 = vmatpush1.msra.mxu0 0.0
  %1450 = vmatprep.subr.mxu0 0.0
  %1451 = vmatpush1.msra.mxu0 0.0
  %1452 = vmatprep.subr.mxu0 0.0
  %1453 = vmatpush1.msra.mxu0 0.0
  %1454 = vmatprep.subr.mxu0 0.0
  %1455 = vmatpush1.msra.mxu0 0.0
  %1456 = vmatprep.subr.mxu0 0.0
  %1457 = vmatpush1.msra.mxu0 0.0
  %1458 = vmatprep.subr.mxu0 0.0
  %1459 = vmatpush1.msra.mxu0 0.0
  %1460 = vmatprep.subr.mxu0 0.0
  %1461 = vmatpush1.msra.mxu0 0.0
  %1462 = vmatprep.subr.mxu0 0.0
  %1463 = vmatpush1.msra.mxu0 0.0
  %1464 = vmatprep.mubr.f32.mxu0 0.0
  %1465 = vmatmul.mubr.f32.gmra.mrb[0].mxu0 %v1395
  %v1466 = vpop.f32.mrb[0].mxu0
  %v1467 = vadd.f32 %v82, %v1466
  %v1468 = vpop.f32.mrb[0].mxu0
  %1469 = vmatprep.mubr.f32.mxu0 0.0
  %1470 = vmatmul.mubr.f32.gmra.mrb[0].mxu0 %v1398
  %v1471 = vpop.f32.mrb[0].mxu0
  %v1472 = vadd.f32 %v83, %v1471
  %v1473 = vpop.f32.mrb[0].mxu0
  %1474 = vdwg.mxu0
  %v1475 = vmax.f32 %v1467, 0.0
  %v1476 = vmax.f32 %v1472, 0.0
  %v1478 = vsel %vm267, %v1475, 0
  %v1481 = vsel %vm267, %v1476, 0
  %1483 = vmatprep.subr.mxu0 0.0
  %1484 = vmatpush1.msra.mxu0 %v29
  %1485 = vmatprep.subr.mxu0 0.0
  %1486 = vmatpush1.msra.mxu0 %v30
  %1487 = vmatprep.subr.mxu0 0.0
  %1488 = vmatpush1.msra.mxu0 0.0
  %1489 = vmatprep.subr.mxu0 0.0
  %1490 = vmatpush1.msra.mxu0 0.0
  %1491 = vmatprep.subr.mxu0 0.0
  %1492 = vmatpush1.msra.mxu0 0.0
  %1493 = vmatprep.subr.mxu0 0.0
  %1494 = vmatpush1.msra.mxu0 0.0
  %1495 = vmatprep.subr.mxu0 0.0
  %1496 = vmatpush1.msra.mxu0 0.0
  %1497 = vmatprep.subr.mxu0 0.0
  %1498 = vmatpush1.msra.mxu0 0.0
  %1499 = vmatprep.subr.mxu0 0.0
  %1500 = vmatpush1.msra.mxu0 0.0
  %1501 = vmatprep.subr.mxu0 0.0
  %1502 = vmatpush1.msra.mxu0 0.0
  %1503 = vmatprep.subr.mxu0 0.0
  %1504 = vmatpush1.msra.mxu0 0.0
  %1505 = vmatprep.subr.mxu0 0.0
  %1506 = vmatpush1.msra.mxu0 0.0
  %1507 = vmatprep.subr.mxu0 0.0
  %1508 = vmatpush1.msra.mxu0 0.0
  %1509 = vmatprep.subr.mxu0 0.0
  %1510 = vmatpush1.msra.mxu0 0.0
  %1511 = vmatprep.subr.mxu0 0.0
  %1512 = vmatpush1.msra.mxu0 0.0
  %1513 = vmatprep.subr.mxu0 0.0
  %1514 = vmatpush1.msra.mxu0 0.0
  %1515 = vmatprep.subr.mxu0 0.0
  %1516 = vmatpush1.msra.mxu0 0.0
  %1517 = vmatprep.subr.mxu0 0.0
  %1518 = vmatpush1.msra.mxu0 0.0
  %1519 = vmatprep.subr.mxu0 0.0
  %1520 = vmatpush1.msra.mxu0 0.0
  %1521 = vmatprep.subr.mxu0 0.0
  %1522 = vmatpush1.msra.mxu0 0.0
  %1523 = vmatprep.subr.mxu0 0.0
  %1524 = vmatpush1.msra.mxu0 0.0
  %1525 = vmatprep.subr.mxu0 0.0
  %1526 = vmatpush1.msra.mxu0 0.0
  %1527 = vmatprep.subr.mxu0 0.0
  %1528 = vmatpush1.msra.mxu0 0.0
  %1529 = vmatprep.subr.mxu0 0.0
  %1530 = vmatpush1.msra.mxu0 0.0
  %1531 = vmatprep.subr.mxu0 0.0
  %1532 = vmatpush1.msra.mxu0 0.0
  %1533 = vmatprep.subr.mxu0 0.0
  %1534 = vmatpush1.msra.mxu0 0.0
  %1535 = vmatprep.subr.mxu0 0.0
  %1536 = vmatpush1.msra.mxu0 0.0
  %1537 = vmatprep.subr.mxu0 0.0
  %1538 = vmatpush1.msra.mxu0 0.0
  %1539 = vmatprep.subr.mxu0 0.0
  %1540 = vmatpush1.msra.mxu0 0.0
  %1541 = vmatprep.subr.mxu0 0.0
  %1542 = vmatpush1.msra.mxu0 0.0
  %1543 = vmatprep.subr.mxu0 0.0
  %1544 = vmatpush1.msra.mxu0 0.0
  %1545 = vmatprep.subr.mxu0 0.0
  %1546 = vmatpush1.msra.mxu0 0.0
  %1547 = vmatprep.mubr.f32.mxu0 0.0
  %1548 = vmatmul.mubr.f32.gmra.mrb[0].mxu0 %v1478
  %v1549 = vpop.f32.mrb[0].mxu0
  %v1550 = vadd.f32 %v87, %v1549
  %v1551 = vpop.f32.mrb[0].mxu0
  %1552 = vmatprep.mubr.f32.mxu0 0.0
  %1553 = vmatmul.mubr.f32.gmra.mrb[0].mxu0 %v1481
  %v1554 = vpop.f32.mrb[0].mxu0
  %v1555 = vadd.f32 %v87, %v1554
  %v1556 = vpop.f32.mrb[0].mxu0
  %1557 = vdwg.mxu0
  %v1558 = vmax.f32 %v1550, 0.0
  %v1559 = vmax.f32 %v1555, 0.0
  %v1560 = vlaneseq
  %v1561 = vshrl.u32 %v1560, 7
  %v1562 = vsub.s32 0, %v1561
  %v1563 = vrot.slane %v1558, %v1562
  %v1564 = vsel %vm355, %v1563, 0.0
  %v1565 = vmax.f32 %v1564, 0.0
  %v1566 = vlaneseq
  %v1567 = vshrl.u32 %v1566, 7
  %v1568 = vsub.s32 1, %v1567
  %v1569 = vrot.slane %v1558, %v1568
  %v1570 = vsel %vm365, %v1569, 0.0
  %v1571 = vmax.f32 %v1565, %v1570
  %v1572 = vlaneseq
  %v1573 = vshrl.u32 %v1572, 7
  %v1574 = vsub.s32 2, %v1573
  %v1575 = vrot.slane %v1558, %v1574
  %v1576 = vsel %vm375, %v1575, 0.0
  %v1577 = vmax.f32 %v1571, %v1576
  %v1578 = vlaneseq
  %v1579 = vshrl.u32 %v1578, 7
  %v1580 = vsub.s32 3, %v1579
  %v1581 = vrot.slane %v1558, %v1580
  %v1582 = vsel %vm385, %v1581, 0.0
  %v1583 = vmax.f32 %v1577, %v1582
  %v1584 = vlaneseq
  %v1585 = vshrl.u32 %v1584, 7
  %v1586 = vsub.s32 4, %v1585
  %v1587 = vrot.slane %v1558, %v1586
  %v1588 = vsel %vm395, %v1587, 0.0
  %v1589 = vmax.f32 %v1583, %v1588
  %v1590 = vlaneseq
  %v1591 = vshrl.u32 %v1590, 7
  %v1592 = vsub.s32 5, %v1591
  %v1593 = vrot.slane %v1558, %v1592
  %v1594 = vsel %vm405, %v1593, 0.0
  %v1595 = vmax.f32 %v1589, %v1594
  %v1596 = vlaneseq
  %v1597 = vshrl.u32 %v1596, 7
  %v1598 = vsub.s32 6, %v1597
  %v1599 = vrot.slane %v1558, %v1598
  %v1600 = vsel %vm415, %v1599, 0.0
  %v1601 = vmax.f32 %v1595, %v1600
  %v1602 = vlaneseq
  %v1603 = vshrl.u32 %v1602, 7
  %v1604 = vsub.s32 7, %v1603
  %v1605 = vrot.slane %v1558, %v1604
  %v1606 = vsel %vm425, %v1605, 0.0
  %v1607 = vmax.f32 %v1601, %v1606
  %v1608 = vlaneseq
  %v1609 = vshrl.u32 %v1608, 7
  %v1610 = vsub.s32 0, %v1609
  %v1611 = vrot.slane %v1559, %v1610
  %v1612 = vsel %vm435, %v1611, 0.0
  %v1613 = vmax.f32 %v1607, %v1612
  %v1614 = vlaneseq
  %v1615 = vshrl.u32 %v1614, 7
  %v1616 = vsub.s32 1, %v1615
  %v1617 = vrot.slane %v1559, %v1616
  %v1618 = vsel %vm445, %v1617, 0.0
  %v1619 = vmax.f32 %v1613, %v1618
  %v1620 = vlaneseq
  %v1621 = vshrl.u32 %v1620, 7
  %v1622 = vsub.s32 2, %v1621
  %v1623 = vrot.slane %v1559, %v1622
  %v1624 = vsel %vm455, %v1623, 0.0
  %v1625 = vmax.f32 %v1619, %v1624
  %v1626 = vlaneseq
  %v1627 = vshrl.u32 %v1626, 7
  %v1628 = vsub.s32 3, %v1627
  %v1629 = vrot.slane %v1559, %v1628
  %v1630 = vsel %vm465, %v1629, 0.0
  %v1631 = vmax.f32 %v1625, %v1630
  %v1632 = vlaneseq
  %v1633 = vshrl.u32 %v1632, 7
  %v1634 = vsub.s32 4, %v1633
  %v1635 = vrot.slane %v1559, %v1634
  %v1636 = vsel %vm475, %v1635, 0.0
  %v1637 = vmax.f32 %v1631, %v1636
  %v1638 = vlaneseq
  %v1639 = vshrl.u32 %v1638, 7
  %v1640 = vsub.s32 5, %v1639
  %v1641 = vrot.slane %v1559, %v1640
  %v1642 = vsel %vm485, %v1641, 0.0
  %v1643 = vmax.f32 %v1637, %v1642
  %v1644 = vlaneseq
  %v1645 = vshrl.u32 %v1644, 7
  %v1646 = vsub.s32 6, %v1645
  %v1647 = vrot.slane %v1559, %v1646
  %v1648 = vsel %vm495, %v1647, 0.0
  %v1649 = vmax.f32 %v1643, %v1648
  %v1650 = vlaneseq
  %v1651 = vshrl.u32 %v1650, 7
  %v1652 = vsub.s32 7, %v1651
  %v1653 = vrot.slane %v1559, %v1652
  %v1654 = vsel %vm505, %v1653, 0.0
  %v1655 = vmax.f32 %v1649, %v1654
  %v1657 = vsel %vm512, %v1655, 0
  %1659 = vmatprep.subr.mxu0 0.0
  %1660 = vmatpush1.msra.mxu0 %v33
  %1661 = vmatprep.subr.mxu0 0.0
  %1662 = vmatpush1.msra.mxu0 %v34
  %1663 = vmatprep.subr.mxu0 0.0
  %1664 = vmatpush1.msra.mxu0 %v35
  %1665 = vmatprep.subr.mxu0 0.0
  %1666 = vmatpush1.msra.mxu0 %v36
  %1667 = vmatprep.subr.mxu0 0.0
  %1668 = vmatpush1.msra.mxu0 0.0
  %1669 = vmatprep.subr.mxu0 0.0
  %1670 = vmatpush1.msra.mxu0 0.0
  %1671 = vmatprep.subr.mxu0 0.0
  %1672 = vmatpush1.msra.mxu0 0.0
  %1673 = vmatprep.subr.mxu0 0.0
  %1674 = vmatpush1.msra.mxu0 0.0
  %1675 = vmatprep.subr.mxu0 0.0
  %1676 = vmatpush1.msra.mxu0 0.0
  %1677 = vmatprep.subr.mxu0 0.0
  %1678 = vmatpush1.msra.mxu0 0.0
  %1679 = vmatprep.subr.mxu0 0.0
  %1680 = vmatpush1.msra.mxu0 0.0
  %1681 = vmatprep.subr.mxu0 0.0
  %1682 = vmatpush1.msra.mxu0 0.0
  %1683 = vmatprep.subr.mxu0 0.0
  %1684 = vmatpush1.msra.mxu0 0.0
  %1685 = vmatprep.subr.mxu0 0.0
  %1686 = vmatpush1.msra.mxu0 0.0
  %1687 = vmatprep.subr.mxu0 0.0
  %1688 = vmatpush1.msra.mxu0 0.0
  %1689 = vmatprep.subr.mxu0 0.0
  %1690 = vmatpush1.msra.mxu0 0.0
  %1691 = vmatprep.subr.mxu0 0.0
  %1692 = vmatpush1.msra.mxu0 0.0
  %1693 = vmatprep.subr.mxu0 0.0
  %1694 = vmatpush1.msra.mxu0 0.0
  %1695 = vmatprep.subr.mxu0 0.0
  %1696 = vmatpush1.msra.mxu0 0.0
  %1697 = vmatprep.subr.mxu0 0.0
  %1698 = vmatpush1.msra.mxu0 0.0
  %1699 = vmatprep.subr.mxu0 0.0
  %1700 = vmatpush1.msra.mxu0 0.0
  %1701 = vmatprep.subr.mxu0 0.0
  %1702 = vmatpush1.msra.mxu0 0.0
  %1703 = vmatprep.subr.mxu0 0.0
  %1704 = vmatpush1.msra.mxu0 0.0
  %1705 = vmatprep.subr.mxu0 0.0
  %1706 = vmatpush1.msra.mxu0 0.0
  %1707 = vmatprep.subr.mxu0 0.0
  %1708 = vmatpush1.msra.mxu0 0.0
  %1709 = vmatprep.subr.mxu0 0.0
  %1710 = vmatpush1.msra.mxu0 0.0
  %1711 = vmatprep.subr.mxu0 0.0
  %1712 = vmatpush1.msra.mxu0 0.0
  %1713 = vmatprep.subr.mxu0 0.0
  %1714 = vmatpush1.msra.mxu0 0.0
  %1715 = vmatprep.subr.mxu0 0.0
  %1716 = vmatpush1.msra.mxu0 0.0
  %1717 = vmatprep.subr.mxu0 0.0
  %1718 = vmatpush1.msra.mxu0 0.0
  %1719 = vmatprep.subr.mxu0 0.0
  %1720 = vmatpush1.msra.mxu0 0.0
  %1721 = vmatprep.subr.mxu0 0.0
  %1722 = vmatpush1.msra.mxu0 0.0
  %1723 = vmatprep.mubr.f32.mxu0 0.0
  %1724 = vmatmul.mubr.f32.gmra.mrb[0].mxu0 %v1657
  %v1725 = vpop.f32.mrb[0].mxu0
  %v1726 = vadd.f32 0.0, %v1725
  %v1727 = vpop.f32.mrb[0].mxu0
  %1728 = vdwg.mxu0
  %v1730 = vsel %vm179, %v1318, 0
  %1732 = vmatprep.subr.mxu0 0.0
  %1733 = vmatpush1.msra.mxu0 %v590
  %1734 = vmatprep.subr.mxu0 0.0
  %1735 = vmatpush1.msra.mxu0 0.0
  %1736 = vmatprep.subr.mxu0 0.0
  %1737 = vmatpush1.msra.mxu0 0.0
  %1738 = vmatprep.subr.mxu0 0.0
  %1739 = vmatpush1.msra.mxu0 0.0
  %1740 = vmatprep.subr.mxu0 0.0
  %1741 = vmatpush1.msra.mxu0 0.0
  %1742 = vmatprep.subr.mxu0 0.0
  %1743 = vmatpush1.msra.mxu0 0.0
  %1744 = vmatprep.subr.mxu0 0.0
  %1745 = vmatpush1.msra.mxu0 0.0
  %1746 = vmatprep.subr.mxu0 0.0
  %1747 = vmatpush1.msra.mxu0 0.0
  %1748 = vmatprep.subr.mxu0 0.0
  %1749 = vmatpush1.msra.mxu0 0.0
  %1750 = vmatprep.subr.mxu0 0.0
  %1751 = vmatpush1.msra.mxu0 0.0
  %1752 = vmatprep.subr.mxu0 0.0
  %1753 = vmatpush1.msra.mxu0 0.0
  %1754 = vmatprep.subr.mxu0 0.0
  %1755 = vmatpush1.msra.mxu0 0.0
  %1756 = vmatprep.subr.mxu0 0.0
  %1757 = vmatpush1.msra.mxu0 0.0
  %1758 = vmatprep.subr.mxu0 0.0
  %1759 = vmatpush1.msra.mxu0 0.0
  %1760 = vmatprep.subr.mxu0 0.0
  %1761 = vmatpush1.msra.mxu0 0.0
  %1762 = vmatprep.subr.mxu0 0.0
  %1763 = vmatpush1.msra.mxu0 0.0
  %1764 = vmatprep.subr.mxu0 0.0
  %1765 = vmatpush1.msra.mxu0 0.0
  %1766 = vmatprep.subr.mxu0 0.0
  %1767 = vmatpush1.msra.mxu0 0.0
  %1768 = vmatprep.subr.mxu0 0.0
  %1769 = vmatpush1.msra.mxu0 0.0
  %1770 = vmatprep.subr.mxu0 0.0
  %1771 = vmatpush1.msra.mxu0 0.0
  %1772 = vmatprep.subr.mxu0 0.0
  %1773 = vmatpush1.msra.mxu0 0.0
  %1774 = vmatprep.subr.mxu0 0.0
  %1775 = vmatpush1.msra.mxu0 0.0
  %1776 = vmatprep.subr.mxu0 0.0
  %1777 = vmatpush1.msra.mxu0 0.0
  %1778 = vmatprep.subr.mxu0 0.0
  %1779 = vmatpush1.msra.mxu0 0.0
  %1780 = vmatprep.subr.mxu0 0.0
  %1781 = vmatpush1.msra.mxu0 0.0
  %1782 = vmatprep.subr.mxu0 0.0
  %1783 = vmatpush1.msra.mxu0 0.0
  %1784 = vmatprep.subr.mxu0 0.0
  %1785 = vmatpush1.msra.mxu0 0.0
  %1786 = vmatprep.subr.mxu0 0.0
  %1787 = vmatpush1.msra.mxu0 0.0
  %1788 = vmatprep.subr.mxu0 0.0
  %1789 = vmatpush1.msra.mxu0 0.0
  %1790 = vmatprep.subr.mxu0 0.0
  %1791 = vmatpush1.msra.mxu0 0.0
  %1792 = vmatprep.subr.mxu0 0.0
  %1793 = vmatpush1.msra.mxu0 0.0
  %1794 = vmatprep.subr.mxu0 0.0
  %1795 = vmatpush1.msra.mxu0 0.0
  %1796 = vmatprep.mubr.f32.mxu0 0.0
  %1797 = vmatmul.mubr.f32.gmra.mrb[0].mxu0 %v1730
  %v1798 = vpop.f32.mrb[0].mxu0
  %v1799 = vadd.f32 %v1726, %v1798
  %v1800 = vpop.f32.mrb[0].mxu0
  %1801 = vdwg.mxu0
  %v1802 = vadd.f32 %v1799, %v91
  %v1803 = vmax.f32 %v1802, 0.0
  %v1805 = vsel %vm267, %v1803, 0
  %1807 = vmatprep.subr.mxu0 0.0
  %1808 = vmatpush1.msra.mxu0 %v38
  %1809 = vmatprep.subr.mxu0 0.0
  %1810 = vmatpush1.msra.mxu0 %v39
  %1811 = vmatprep.subr.mxu0 0.0
  %1812 = vmatpush1.msra.mxu0 0.0
  %1813 = vmatprep.subr.mxu0 0.0
  %1814 = vmatpush1.msra.mxu0 0.0
  %1815 = vmatprep.subr.mxu0 0.0
  %1816 = vmatpush1.msra.mxu0 0.0
  %1817 = vmatprep.subr.mxu0 0.0
  %1818 = vmatpush1.msra.mxu0 0.0
  %1819 = vmatprep.subr.mxu0 0.0
  %1820 = vmatpush1.msra.mxu0 0.0
  %1821 = vmatprep.subr.mxu0 0.0
  %1822 = vmatpush1.msra.mxu0 0.0
  %1823 = vmatprep.subr.mxu0 0.0
  %1824 = vmatpush1.msra.mxu0 0.0
  %1825 = vmatprep.subr.mxu0 0.0
  %1826 = vmatpush1.msra.mxu0 0.0
  %1827 = vmatprep.subr.mxu0 0.0
  %1828 = vmatpush1.msra.mxu0 0.0
  %1829 = vmatprep.subr.mxu0 0.0
  %1830 = vmatpush1.msra.mxu0 0.0
  %1831 = vmatprep.subr.mxu0 0.0
  %1832 = vmatpush1.msra.mxu0 0.0
  %1833 = vmatprep.subr.mxu0 0.0
  %1834 = vmatpush1.msra.mxu0 0.0
  %1835 = vmatprep.subr.mxu0 0.0
  %1836 = vmatpush1.msra.mxu0 0.0
  %1837 = vmatprep.subr.mxu0 0.0
  %1838 = vmatpush1.msra.mxu0 0.0
  %1839 = vmatprep.subr.mxu0 0.0
  %1840 = vmatpush1.msra.mxu0 0.0
  %1841 = vmatprep.subr.mxu0 0.0
  %1842 = vmatpush1.msra.mxu0 0.0
  %1843 = vmatprep.subr.mxu0 0.0
  %1844 = vmatpush1.msra.mxu0 0.0
  %1845 = vmatprep.subr.mxu0 0.0
  %1846 = vmatpush1.msra.mxu0 0.0
  %1847 = vmatprep.subr.mxu0 0.0
  %1848 = vmatpush1.msra.mxu0 0.0
  %1849 = vmatprep.subr.mxu0 0.0
  %1850 = vmatpush1.msra.mxu0 0.0
  %1851 = vmatprep.subr.mxu0 0.0
  %1852 = vmatpush1.msra.mxu0 0.0
  %1853 = vmatprep.subr.mxu0 0.0
  %1854 = vmatpush1.msra.mxu0 0.0
  %1855 = vmatprep.subr.mxu0 0.0
  %1856 = vmatpush1.msra.mxu0 0.0
  %1857 = vmatprep.subr.mxu0 0.0
  %1858 = vmatpush1.msra.mxu0 0.0
  %1859 = vmatprep.subr.mxu0 0.0
  %1860 = vmatpush1.msra.mxu0 0.0
  %1861 = vmatprep.subr.mxu0 0.0
  %1862 = vmatpush1.msra.mxu0 0.0
  %1863 = vmatprep.subr.mxu0 0.0
  %1864 = vmatpush1.msra.mxu0 0.0
  %1865 = vmatprep.subr.mxu0 0.0
  %1866 = vmatpush1.msra.mxu0 0.0
  %1867 = vmatprep.subr.mxu0 0.0
  %1868 = vmatpush1.msra.mxu0 0.0
  %1869 = vmatprep.subr.mxu0 0.0
  %1870 = vmatpush1.msra.mxu0 0.0
  %1871 = vmatprep.mubr.f32.mxu0 0.0
  %1872 = vmatmul.mubr.f32.gmra.mrb[0].mxu0 %v1805
  %v1873 = vpop.f32.mrb[0].mxu0
  %v1874 = vadd.f32 %v95, %v1873
  %v1875 = vpop.f32.mrb[0].mxu0
  %1876 = vdwg.mxu0
  %v1877 = vxor.u32 %v1874, 2147483648
  %v1878 = vmul.f32 %v1877, 1.442695
  %v1879 = vpow.pop %v1878
  %v1880 = vadd.f32 %v1879, 1.0
  %v1881 = vrcp.pop %v1880
  %v1882 = vmul.f32 1.0, %v1881
  %1884 = vset.pattern.permute.xlu0 0
  %1885 = vperm.xlu0 %1884, %v1882
  %v1886 = vpop.permute.xlu0 %1885
  %v1888 = vsel %vm96, %v1886, %v20
  %1889 = vst.msk [vmem:[%s5] sm:$0xff] %vm179, %v1888
  // Predicated region
  $region22: #{gcnet_forward.1} parent=0 // pred_check
    _
  $region23: #{gcnet_forward.1} parent=0 // pred_check_branch
    %1891 = sbr.rel (0) target = $region25
  $region24: #{gcnet_forward.1} parent=0 // pred_region
    _
  $region25: #{gcnet_forward.1} parent=0 // pred_fallthru
    _
  // Predicated region
  $region26: #{gcnet_forward.1} parent=0 // pred_check
    _
  $region27: #{gcnet_forward.1} parent=0 // pred_check_branch
    %1893 = sbr.rel (0) target = $region29
  $region28: #{gcnet_forward.1} parent=0 // pred_region
    _
  $region29: #{gcnet_forward.1} parent=0 // pred_fallthru
    _

</llo_original>
